<compile_context>
chip_gen: v7x
topology: tpu7x:2x2x1
jax: 0.10.0
libtpu: 0.0.40
codegen_flags: <defaults>
</compile_context>

<pallas_src>
import functools

import jax
import jax.numpy as jnp
import numpy as np
from jax.experimental import pallas as pl
from jax.experimental.pallas import tpu as pltpu


def _round_up(n, m):
    return ((n + m - 1) // m) * m


def _conv3x3_chunked(x, w_ref, *, cin, W, masks):
    """3x3 'same' cross-correlation, channels-in-sublanes / pixels-in-lanes.

    x      : (cin, N)  activations, N = TB*H*W (each batch element owns a
             contiguous H*W-lane chunk, H*W a multiple of 128).
    w_ref  : (3, cout, 3*cin + 1) packed weights.  [kh, :, :3*cin] holds the
             three dw taps of kernel row kh; [1, :, 3*cin] holds the bias.
    masks  : dict (dh, dw) -> (1, N) bool mask (or None), hoisted by caller.
    Returns (cout, N) float32.
    """
    N = x.shape[1]
    acc = None
    for kh, dh in enumerate((-1, 0, 1)):          # one K-chunk per kernel row
        pieces = []
        for dw in (-1, 0, 1):
            s = dh * W + dw
            # win[p] = x[p + s]  (cyclic; invalid positions masked to 0 below)
            win = x if s == 0 else pltpu.roll(x, (-s) % N, axis=1)
            m = masks[(dh, dw)]
            if m is not None:
                win = jnp.where(m, win, 0.0)
            pieces.append(win)
        chunk = jnp.concatenate(pieces, axis=0)    # (3*cin, N), sublane-aligned
        w_full = w_ref[kh]                         # (cout, 3*cin + 1)
        part = jnp.dot(w_full[:, :3 * cin], chunk,
                       preferred_element_type=jnp.float32)
        if kh == 1:
            part = part + w_full[:, 3 * cin:]      # bias column (cout, 1)
        acc = part if acc is None else acc + part
    return acc


def decoder_kernel(z_ref, w1_ref, w2_ref, o_ref, *, H, W, TB, cin1, cmid):
    """Fused Decoder forward for TB batch elements.

    z_ref  : (TB, cin1, H*W)   input, channels-first, flat spatial (zero-padded
                               channels beyond the true latent_size)
    w1_ref : (3, cmid, 3*cin1 + 1)   conv1 packed chunks + bias column
    w2_ref : (3, C,    3*cmid + 1)   conv2 packed chunks (latent sum folded) + bias
    o_ref  : (TB, C, H*W)      output, lane-dense
    """
    HW = H * W
    N = TB * HW

    # Gather the TB batch elements into the lane axis (256-lane aligned concat).
    if TB == 1:
        x = z_ref[0]
    else:
        x = jnp.concatenate([z_ref[b] for b in range(TB)], axis=1)   # (cin1, N)

    # Edge masks, computed ONCE per grid step at (1, N), broadcast in jnp.where.
    flat = jax.lax.broadcasted_iota(jnp.int32, (1, N), 1)
    col = flat % W          # column within the image row
    pos = flat % HW         # pixel index within its batch element
    m_l = col >= 1          # tap dw = -1 valid
    m_r = col < (W - 1)     # tap dw = +1 valid
    m_t = pos >= W          # tap dh = -1 valid
    m_b = pos < (HW - W)    # tap dh = +1 valid

    def combine(dh, dw):
        ms = []
        if dh == -1:
            ms.append(m_t)
        elif dh == 1:
            ms.append(m_b)
        if dw == -1:
            ms.append(m_l)
        elif dw == 1:
            ms.append(m_r)
        if not ms:
            return None
        m = ms[0]
        for extra in ms[1:]:
            m = m & extra
        return m

    masks = {(dh, dw): combine(dh, dw) for dh in (-1, 0, 1) for dw in (-1, 0, 1)}

    h = _conv3x3_chunked(x, w1_ref, cin=cin1, W=W, masks=masks)   # (cmid, N)
    h = jnp.where(h > 0, h, 0.01 * h)                             # leaky_relu, slope 0.01
    y = _conv3x3_chunked(h, w2_ref, cin=cmid, W=W, masks=masks)   # (C, N)

    for b in range(TB):                       # 256-lane aligned output splits
        o_ref[b] = y[:, b * HW:(b + 1) * HW]


def convT_weight_to_matrix(w):
    """ConvTranspose2d weight (Cin, Cout, 3, 3), stride=1, padding=1  ->
    equivalent 'same' 3x3 cross-correlation matrix (Cout, 9*Cin),
    column index = (kh*3 + kw)*Cin + cin (kh = dh+1), taps spatially flipped."""
    cin, cout = w.shape[0], w.shape[1]
    wf = w[:, :, ::-1, ::-1]                                    # spatial flip
    return jnp.transpose(wf, (1, 2, 3, 0)).reshape(cout, 9 * cin)


def pack_conv_weight(w_mat, b_vec, cin):
    """(cout, 9*cin) + (cout,) -> (3, cout, 3*cin + 1).  One K-chunk per kernel
    row kh; the bias lives in the last column of the kh=1 chunk."""
    cout = w_mat.shape[0]
    chunks = jnp.transpose(w_mat.reshape(cout, 3, 3 * cin), (1, 0, 2))
    bias = jnp.zeros((3, cout, 1), jnp.float32).at[1, :, 0].set(b_vec)
    return jnp.concatenate([chunks, bias], axis=2)


def decoder_forward(z_nchw, w1, b1, w2, b2, latent_size, color_channels):
    B, L, H, W = z_nchw.shape
    assert L == latent_size
    C = color_channels
    C4 = 4 * L
    HW = H * W

    cin1 = _round_up(L, 8)     # conv1 input channels, sublane-aligned
    cmid = _round_up(C4, 8)    # conv1 output / conv2 input channels

    # Batch blocking: several elements per grid step (amortizes per-step overhead).
    TB = min(B, 4)
    Bp = _round_up(B, TB)

    # Channels-first, flat spatial; pad channels L -> cin1 and batch B -> Bp.
    z_flat = z_nchw.reshape(B, L, HW).astype(jnp.float32)
    z_pad = jnp.zeros((Bp, cin1, HW), jnp.float32).at[:B, :L, :].set(z_flat)

    # conv1: embed into padded channel counts, build packed im2col chunks.
    w1e = jnp.zeros((cin1, cmid, 3, 3), jnp.float32).at[:L, :C4].set(
        w1.astype(jnp.float32))
    b1e = jnp.zeros((cmid,), jnp.float32).at[:C4].set(b1.astype(jnp.float32))
    w1_packed = pack_conv_weight(convT_weight_to_matrix(w1e), b1e, cin1)

    # conv2: fold the latent-group sum into weights/bias (exact, linear), then
    # embed into padded input channel count and pack.
    w2f = w2.astype(jnp.float32).reshape(C4, L, C, 3, 3).sum(axis=1)   # (C4, C, 3, 3)
    w2e = jnp.zeros((cmid, C, 3, 3), jnp.float32).at[:C4].set(w2f)
    b2f = b2.astype(jnp.float32).reshape(L, C).sum(axis=0)             # (C,)
    w2_packed = pack_conv_weight(convT_weight_to_matrix(w2e), b2f, cmid)

    kernel = functools.partial(decoder_kernel, H=H, W=W, TB=TB,
                               cin1=cin1, cmid=cmid)

    out_flat = pl.pallas_call(
        kernel,
        out_shape=jax.ShapeDtypeStruct((Bp, C, HW), jnp.float32),
        grid_spec=pltpu.PrefetchScalarGridSpec(
            num_scalar_prefetch=0,
            grid=(Bp // TB,),
            in_specs=[
                pl.BlockSpec((TB, cin1, HW), lambda i: (i, 0, 0)),
                pl.BlockSpec((3, cmid, 3 * cin1 + 1), lambda i: (0, 0, 0)),
                pl.BlockSpec((3, C, 3 * cmid + 1), lambda i: (0, 0, 0)),
            ],
            out_specs=pl.BlockSpec((TB, C, HW), lambda i: (i, 0, 0)),
        ),
        compiler_params=pltpu.CompilerParams(
            dimension_semantics=("parallel",)),   # batch blocks independent (2 TCs on v7x)
    )(z_pad, w1_packed, w2_packed)

    # Drop batch padding; back to PyTorch NCHW (free reshape, no transpose).
    return out_flat[:B].reshape(B, C, H, W)


# ---------------- numpy reference (mirrors the PyTorch module) ----------------
def ref_decoder(z, w1, b1, w2, b2, latent_size, color_channels):
    z = np.asarray(z, np.float32)
    w1 = np.asarray(w1, np.float32); b1 = np.asarray(b1, np.float32)
    w2 = np.asarray(w2, np.float32); b2 = np.asarray(b2, np.float32)

    def convT(x, w, b):
        B, Cin, H, W = x.shape
        Cout = w.shape[1]
        xp = np.pad(x, ((0, 0), (0, 0), (1, 1), (1, 1)))
        out = np.zeros((B, Cout, H, W), np.float32)
        for kh in range(3):
            for kw in range(3):
                patch = xp[:, :, 2 - kh:2 - kh + H, 2 - kw:2 - kw + W]
                out += np.einsum('bchw,cd->bdhw', patch, w[:, :, kh, kw])
        return out + b[None, :, None, None]

    B, L, H, W = z.shape
    h = convT(z, w1, b1)
    h = np.where(h > 0, h, 0.01 * h)
    y = convT(h, w2, b2)
    y = y.reshape(B, latent_size, color_channels, H, W).sum(axis=1)
    return y


if __name__ == "__main__":
    latent_size = 4
    color_channels = 3
    B, H, W = 2, 16, 16

    key = jax.random.PRNGKey(0)
    k1, k2, k3, k4, k5 = jax.random.split(key, 5)

    # Deterministic parameter init (shapes match nn.ConvTranspose2d weights).
    w1 = 0.1 * jax.random.normal(k1, (latent_size, latent_size * 4, 3, 3), jnp.float32)
    b1 = 0.1 * jax.random.normal(k2, (latent_size * 4,), jnp.float32)
    w2 = 0.1 * jax.random.normal(k3, (latent_size * 4, latent_size * color_channels, 3, 3), jnp.float32)
    b2 = 0.1 * jax.random.normal(k4, (latent_size * color_channels,), jnp.float32)

    z_map = jax.random.normal(k5, (B, latent_size, H, W), jnp.float32)

    out = decoder_forward(z_map, w1, b1, w2, b2, latent_size, color_channels)
    out = jax.block_until_ready(out)

    ref = ref_decoder(z_map, w1, b1, w2, b2, latent_size, color_channels)
    assert out.shape == (B, color_channels, H, W)
    np.testing.assert_allclose(np.asarray(out), ref, rtol=1e-4, atol=1e-4)

    print("KERNEL_OK")
</pallas_src>

<mosaic_0001>
module attributes {stable_mosaic.version = 11 : i64} {
  func.func @decoder_kernel(%arg0: i32, %arg1: memref<2x8x256xf32, #tpu.memory_space<vmem>>, %arg2: memref<3x16x25xf32, #tpu.memory_space<vmem>>, %arg3: memref<3x3x49xf32, #tpu.memory_space<vmem>>, %arg4: memref<2x3x256xf32, #tpu.memory_space<vmem>>) attributes {dimension_semantics = [#tpu.dimension_semantics<parallel>], iteration_bounds = array<i64: 1>, scalar_prefetch = 0 : i64, scratch_operands = 0 : i64, tpu.core_type = #tpu.core_type<tc>, window_params = [{transform_indices = @transform_0, window_bounds = array<i64: 2, 8, 256>}, {pipeline_mode = #tpu.pipeline_mode<synchronous>, transform_indices = @transform_1, window_bounds = array<i64: 3, 16, 25>}, {pipeline_mode = #tpu.pipeline_mode<synchronous>, transform_indices = @transform_2, window_bounds = array<i64: 3, 3, 49>}, {transform_indices = @transform_3, window_bounds = array<i64: 2, 3, 256>}]} {
    %c0 = arith.constant 0 : index
    %c0_0 = arith.constant 0 : index
    %c0_1 = arith.constant 0 : index
    %0 = vector.load %arg1[%c0, %c0_0, %c0_1] : memref<2x8x256xf32, #tpu.memory_space<vmem>>, vector<1x8x256xf32>
    %1 = vector.shape_cast %0 : vector<1x8x256xf32> to vector<8x256xf32>
    %c1 = arith.constant 1 : index
    %c0_2 = arith.constant 0 : index
    %c0_3 = arith.constant 0 : index
    %2 = vector.load %arg1[%c1, %c0_2, %c0_3] : memref<2x8x256xf32, #tpu.memory_space<vmem>>, vector<1x8x256xf32>
    %3 = vector.shape_cast %2 : vector<1x8x256xf32> to vector<8x256xf32>
    %4 = tpu.concatenate %1, %3 in 1 : vector<8x256xf32>, vector<8x256xf32> -> vector<8x512xf32>
    %5 = tpu.iota {dimensions = array<i32: 1>} : vector<1x512xi32>
    %c16_i32 = arith.constant 16 : i32
    %c0_i32 = arith.constant 0 : i32
    %6 = arith.cmpi eq, %c16_i32, %c0_i32 : i32
    %c1_i32 = arith.constant 1 : i32
    %7 = arith.select %6, %c1_i32, %c16_i32 : i32
    %8 = vector.broadcast %7 : i32 to vector<1x512xi32>
    %9 = arith.remsi %5, %8 : vector<1x512xi32>
    %c0_i32_4 = arith.constant 0 : i32
    %10 = vector.broadcast %c0_i32_4 : i32 to vector<1x512xi32>
    %11 = arith.cmpi ne, %9, %10 : vector<1x512xi32>
    %c0_i32_5 = arith.constant 0 : i32
    %12 = vector.broadcast %c0_i32_5 : i32 to vector<1x512xi32>
    %13 = arith.cmpi slt, %9, %12 : vector<1x512xi32>
    %c0_i32_6 = arith.constant 0 : i32
    %14 = arith.cmpi slt, %7, %c0_i32_6 : i32
    %15 = vector.broadcast %14 : i1 to vector<1x512xi1>
    %16 = vector.broadcast %15 : vector<1x512xi1> to vector<1x512xi1>
    %17 = arith.xori %13, %16 : vector<1x512xi1>
    %18 = arith.andi %17, %11 : vector<1x512xi1>
    %19 = vector.broadcast %7 : i32 to vector<1x512xi32>
    %20 = arith.addi %9, %19 : vector<1x512xi32>
    %21 = arith.select %18, %20, %9 : vector<1x512xi1>, vector<1x512xi32>
    %c256_i32 = arith.constant 256 : i32
    %c0_i32_7 = arith.constant 0 : i32
    %22 = arith.cmpi eq, %c256_i32, %c0_i32_7 : i32
    %c1_i32_8 = arith.constant 1 : i32
    %23 = arith.select %22, %c1_i32_8, %c256_i32 : i32
    %24 = vector.broadcast %23 : i32 to vector<1x512xi32>
    %25 = arith.remsi %5, %24 : vector<1x512xi32>
    %c0_i32_9 = arith.constant 0 : i32
    %26 = vector.broadcast %c0_i32_9 : i32 to vector<1x512xi32>
    %27 = arith.cmpi ne, %25, %26 : vector<1x512xi32>
    %c0_i32_10 = arith.constant 0 : i32
    %28 = vector.broadcast %c0_i32_10 : i32 to vector<1x512xi32>
    %29 = arith.cmpi slt, %25, %28 : vector<1x512xi32>
    %c0_i32_11 = arith.constant 0 : i32
    %30 = arith.cmpi slt, %23, %c0_i32_11 : i32
    %31 = vector.broadcast %30 : i1 to vector<1x512xi1>
    %32 = vector.broadcast %31 : vector<1x512xi1> to vector<1x512xi1>
    %33 = arith.xori %29, %32 : vector<1x512xi1>
    %34 = arith.andi %33, %27 : vector<1x512xi1>
    %35 = vector.broadcast %23 : i32 to vector<1x512xi32>
    %36 = arith.addi %25, %35 : vector<1x512xi32>
    %37 = arith.select %34, %36, %25 : vector<1x512xi1>, vector<1x512xi32>
    %c1_i32_12 = arith.constant 1 : i32
    %38 = vector.broadcast %c1_i32_12 : i32 to vector<1x512xi32>
    %39 = arith.cmpi sge, %21, %38 : vector<1x512xi32>
    %c15_i32 = arith.constant 15 : i32
    %40 = vector.broadcast %c15_i32 : i32 to vector<1x512xi32>
    %41 = arith.cmpi slt, %21, %40 : vector<1x512xi32>
    %c16_i32_13 = arith.constant 16 : i32
    %42 = vector.broadcast %c16_i32_13 : i32 to vector<1x512xi32>
    %43 = arith.cmpi sge, %37, %42 : vector<1x512xi32>
    %c240_i32 = arith.constant 240 : i32
    %44 = vector.broadcast %c240_i32 : i32 to vector<1x512xi32>
    %45 = arith.cmpi slt, %37, %44 : vector<1x512xi32>
    %46 = arith.andi %43, %39 : vector<1x512xi1>
    %47 = arith.andi %43, %41 : vector<1x512xi1>
    %48 = arith.andi %45, %39 : vector<1x512xi1>
    %49 = arith.andi %45, %41 : vector<1x512xi1>
    %c17_i32 = arith.constant 17 : i32
    %50 = tpu.dynamic_rotate %4 by %c17_i32 dim 1 : vector<8x512xf32>, i32 -> vector<8x512xf32>
    %cst = arith.constant 0.000000e+00 : f32
    %51 = vector.shape_cast %46 : vector<1x512xi1> to vector<1x512xi1>
    %52 = vector.broadcast %51 : vector<1x512xi1> to vector<8x512xi1>
    %53 = vector.broadcast %cst : f32 to vector<8x512xf32>
    %54 = arith.select %52, %50, %53 : vector<8x512xi1>, vector<8x512xf32>
    %c16_i32_14 = arith.constant 16 : i32
    %55 = tpu.dynamic_rotate %4 by %c16_i32_14 dim 1 : vector<8x512xf32>, i32 -> vector<8x512xf32>
    %cst_15 = arith.constant 0.000000e+00 : f32
    %56 = vector.shape_cast %43 : vector<1x512xi1> to vector<1x512xi1>
    %57 = vector.broadcast %56 : vector<1x512xi1> to vector<8x512xi1>
    %58 = vector.broadcast %cst_15 : f32 to vector<8x512xf32>
    %59 = arith.select %57, %55, %58 : vector<8x512xi1>, vector<8x512xf32>
    %c15_i32_16 = arith.constant 15 : i32
    %60 = tpu.dynamic_rotate %4 by %c15_i32_16 dim 1 : vector<8x512xf32>, i32 -> vector<8x512xf32>
    %cst_17 = arith.constant 0.000000e+00 : f32
    %61 = vector.shape_cast %47 : vector<1x512xi1> to vector<1x512xi1>
    %62 = vector.broadcast %61 : vector<1x512xi1> to vector<8x512xi1>
    %63 = vector.broadcast %cst_17 : f32 to vector<8x512xf32>
    %64 = arith.select %62, %60, %63 : vector<8x512xi1>, vector<8x512xf32>
    %65 = tpu.concatenate %54, %59, %64 in 0 : vector<8x512xf32>, vector<8x512xf32>, vector<8x512xf32> -> vector<24x512xf32>
    %c0_18 = arith.constant 0 : index
    %c0_19 = arith.constant 0 : index
    %c0_20 = arith.constant 0 : index
    %66 = vector.load %arg2[%c0_18, %c0_19, %c0_20] : memref<3x16x25xf32, #tpu.memory_space<vmem>>, vector<1x16x25xf32>
    %67 = vector.shape_cast %66 : vector<1x16x25xf32> to vector<16x25xf32>
    %68 = vector.extract_strided_slice %67 {offsets = [0, 0], sizes = [16, 24], strides = [1, 1]} : vector<16x25xf32> to vector<16x24xf32>
    %cst_21 = arith.constant dense<0.000000e+00> : vector<16x512xf32>
    %69 = tpu.matmul %68, %65, %cst_21 {dimension_numbers = #tpu.dot_dimension_numbers<[1], [0], [0], [1], [0, 0, 1, 1], [], []>} : vector<16x24xf32>, vector<24x512xf32>, vector<16x512xf32> -> vector<16x512xf32>
    %c1_i32_22 = arith.constant 1 : i32
    %70 = tpu.dynamic_rotate %4 by %c1_i32_22 dim 1 : vector<8x512xf32>, i32 -> vector<8x512xf32>
    %cst_23 = arith.constant 0.000000e+00 : f32
    %71 = vector.shape_cast %39 : vector<1x512xi1> to vector<1x512xi1>
    %72 = vector.broadcast %71 : vector<1x512xi1> to vector<8x512xi1>
    %73 = vector.broadcast %cst_23 : f32 to vector<8x512xf32>
    %74 = arith.select %72, %70, %73 : vector<8x512xi1>, vector<8x512xf32>
    %c511_i32 = arith.constant 511 : i32
    %75 = tpu.dynamic_rotate %4 by %c511_i32 dim 1 : vector<8x512xf32>, i32 -> vector<8x512xf32>
    %cst_24 = arith.constant 0.000000e+00 : f32
    %76 = vector.shape_cast %41 : vector<1x512xi1> to vector<1x512xi1>
    %77 = vector.broadcast %76 : vector<1x512xi1> to vector<8x512xi1>
    %78 = vector.broadcast %cst_24 : f32 to vector<8x512xf32>
    %79 = arith.select %77, %75, %78 : vector<8x512xi1>, vector<8x512xf32>
    %80 = tpu.concatenate %74, %4, %79 in 0 : vector<8x512xf32>, vector<8x512xf32>, vector<8x512xf32> -> vector<24x512xf32>
    %c1_25 = arith.constant 1 : index
    %c0_26 = arith.constant 0 : index
    %c0_27 = arith.constant 0 : index
    %81 = vector.load %arg2[%c1_25, %c0_26, %c0_27] : memref<3x16x25xf32, #tpu.memory_space<vmem>>, vector<1x16x25xf32>
    %82 = vector.shape_cast %81 : vector<1x16x25xf32> to vector<16x25xf32>
    %83 = vector.extract_strided_slice %82 {offsets = [0, 0], sizes = [16, 24], strides = [1, 1]} : vector<16x25xf32> to vector<16x24xf32>
    %cst_28 = arith.constant dense<0.000000e+00> : vector<16x512xf32>
    %84 = tpu.matmul %83, %80, %cst_28 {dimension_numbers = #tpu.dot_dimension_numbers<[1], [0], [0], [1], [0, 0, 1, 1], [], []>} : vector<16x24xf32>, vector<24x512xf32>, vector<16x512xf32> -> vector<16x512xf32>
    %85 = vector.extract_strided_slice %82 {offsets = [0, 24], sizes = [16, 1], strides = [1, 1]} : vector<16x25xf32> to vector<16x1xf32>
    %86 = vector.broadcast %85 : vector<16x1xf32> to vector<16x512xf32>
    %87 = arith.addf %84, %86 : vector<16x512xf32>
    %88 = arith.addf %69, %87 : vector<16x512xf32>
    %c497_i32 = arith.constant 497 : i32
    %89 = tpu.dynamic_rotate %4 by %c497_i32 dim 1 : vector<8x512xf32>, i32 -> vector<8x512xf32>
    %cst_29 = arith.constant 0.000000e+00 : f32
    %90 = vector.shape_cast %48 : vector<1x512xi1> to vector<1x512xi1>
    %91 = vector.broadcast %90 : vector<1x512xi1> to vector<8x512xi1>
    %92 = vector.broadcast %cst_29 : f32 to vector<8x512xf32>
    %93 = arith.select %91, %89, %92 : vector<8x512xi1>, vector<8x512xf32>
    %c496_i32 = arith.constant 496 : i32
    %94 = tpu.dynamic_rotate %4 by %c496_i32 dim 1 : vector<8x512xf32>, i32 -> vector<8x512xf32>
    %cst_30 = arith.constant 0.000000e+00 : f32
    %95 = vector.shape_cast %45 : vector<1x512xi1> to vector<1x512xi1>
    %96 = vector.broadcast %95 : vector<1x512xi1> to vector<8x512xi1>
    %97 = vector.broadcast %cst_30 : f32 to vector<8x512xf32>
    %98 = arith.select %96, %94, %97 : vector<8x512xi1>, vector<8x512xf32>
    %c495_i32 = arith.constant 495 : i32
    %99 = tpu.dynamic_rotate %4 by %c495_i32 dim 1 : vector<8x512xf32>, i32 -> vector<8x512xf32>
    %cst_31 = arith.constant 0.000000e+00 : f32
    %100 = vector.shape_cast %49 : vector<1x512xi1> to vector<1x512xi1>
    %101 = vector.broadcast %100 : vector<1x512xi1> to vector<8x512xi1>
    %102 = vector.broadcast %cst_31 : f32 to vector<8x512xf32>
    %103 = arith.select %101, %99, %102 : vector<8x512xi1>, vector<8x512xf32>
    %104 = tpu.concatenate %93, %98, %103 in 0 : vector<8x512xf32>, vector<8x512xf32>, vector<8x512xf32> -> vector<24x512xf32>
    %c2 = arith.constant 2 : index
    %c0_32 = arith.constant 0 : index
    %c0_33 = arith.constant 0 : index
    %105 = vector.load %arg2[%c2, %c0_32, %c0_33] : memref<3x16x25xf32, #tpu.memory_space<vmem>>, vector<1x16x25xf32>
    %106 = vector.shape_cast %105 : vector<1x16x25xf32> to vector<16x25xf32>
    %107 = vector.extract_strided_slice %106 {offsets = [0, 0], sizes = [16, 24], strides = [1, 1]} : vector<16x25xf32> to vector<16x24xf32>
    %cst_34 = arith.constant dense<0.000000e+00> : vector<16x512xf32>
    %108 = tpu.matmul %107, %104, %cst_34 {dimension_numbers = #tpu.dot_dimension_numbers<[1], [0], [0], [1], [0, 0, 1, 1], [], []>} : vector<16x24xf32>, vector<24x512xf32>, vector<16x512xf32> -> vector<16x512xf32>
    %109 = arith.addf %88, %108 : vector<16x512xf32>
    %cst_35 = arith.constant 0.000000e+00 : f32
    %110 = vector.broadcast %cst_35 : f32 to vector<16x512xf32>
    %111 = arith.cmpf ogt, %109, %110 : vector<16x512xf32>
    %cst_36 = arith.constant 0.00999999977 : f32
    %112 = vector.broadcast %cst_36 : f32 to vector<16x512xf32>
    %113 = arith.mulf %112, %109 : vector<16x512xf32>
    %114 = arith.select %111, %109, %113 : vector<16x512xi1>, vector<16x512xf32>
    %c17_i32_37 = arith.constant 17 : i32
    %115 = tpu.dynamic_rotate %114 by %c17_i32_37 dim 1 : vector<16x512xf32>, i32 -> vector<16x512xf32>
    %cst_38 = arith.constant 0.000000e+00 : f32
    %116 = vector.shape_cast %46 : vector<1x512xi1> to vector<1x512xi1>
    %117 = vector.broadcast %116 : vector<1x512xi1> to vector<16x512xi1>
    %118 = vector.broadcast %cst_38 : f32 to vector<16x512xf32>
    %119 = arith.select %117, %115, %118 : vector<16x512xi1>, vector<16x512xf32>
    %c16_i32_39 = arith.constant 16 : i32
    %120 = tpu.dynamic_rotate %114 by %c16_i32_39 dim 1 : vector<16x512xf32>, i32 -> vector<16x512xf32>
    %cst_40 = arith.constant 0.000000e+00 : f32
    %121 = vector.shape_cast %43 : vector<1x512xi1> to vector<1x512xi1>
    %122 = vector.broadcast %121 : vector<1x512xi1> to vector<16x512xi1>
    %123 = vector.broadcast %cst_40 : f32 to vector<16x512xf32>
    %124 = arith.select %122, %120, %123 : vector<16x512xi1>, vector<16x512xf32>
    %c15_i32_41 = arith.constant 15 : i32
    %125 = tpu.dynamic_rotate %114 by %c15_i32_41 dim 1 : vector<16x512xf32>, i32 -> vector<16x512xf32>
    %cst_42 = arith.constant 0.000000e+00 : f32
    %126 = vector.shape_cast %47 : vector<1x512xi1> to vector<1x512xi1>
    %127 = vector.broadcast %126 : vector<1x512xi1> to vector<16x512xi1>
    %128 = vector.broadcast %cst_42 : f32 to vector<16x512xf32>
    %129 = arith.select %127, %125, %128 : vector<16x512xi1>, vector<16x512xf32>
    %130 = tpu.concatenate %119, %124, %129 in 0 : vector<16x512xf32>, vector<16x512xf32>, vector<16x512xf32> -> vector<48x512xf32>
    %c0_43 = arith.constant 0 : index
    %c0_44 = arith.constant 0 : index
    %c0_45 = arith.constant 0 : index
    %131 = vector.load %arg3[%c0_43, %c0_44, %c0_45] : memref<3x3x49xf32, #tpu.memory_space<vmem>>, vector<1x3x49xf32>
    %132 = vector.shape_cast %131 : vector<1x3x49xf32> to vector<3x49xf32>
    %133 = vector.extract_strided_slice %132 {offsets = [0, 0], sizes = [3, 48], strides = [1, 1]} : vector<3x49xf32> to vector<3x48xf32>
    %cst_46 = arith.constant dense<0.000000e+00> : vector<3x512xf32>
    %134 = tpu.matmul %133, %130, %cst_46 {dimension_numbers = #tpu.dot_dimension_numbers<[1], [0], [0], [1], [0, 0, 1, 1], [], []>} : vector<3x48xf32>, vector<48x512xf32>, vector<3x512xf32> -> vector<3x512xf32>
    %c1_i32_47 = arith.constant 1 : i32
    %135 = tpu.dynamic_rotate %114 by %c1_i32_47 dim 1 : vector<16x512xf32>, i32 -> vector<16x512xf32>
    %cst_48 = arith.constant 0.000000e+00 : f32
    %136 = vector.shape_cast %39 : vector<1x512xi1> to vector<1x512xi1>
    %137 = vector.broadcast %136 : vector<1x512xi1> to vector<16x512xi1>
    %138 = vector.broadcast %cst_48 : f32 to vector<16x512xf32>
    %139 = arith.select %137, %135, %138 : vector<16x512xi1>, vector<16x512xf32>
    %c511_i32_49 = arith.constant 511 : i32
    %140 = tpu.dynamic_rotate %114 by %c511_i32_49 dim 1 : vector<16x512xf32>, i32 -> vector<16x512xf32>
    %cst_50 = arith.constant 0.000000e+00 : f32
    %141 = vector.shape_cast %41 : vector<1x512xi1> to vector<1x512xi1>
    %142 = vector.broadcast %141 : vector<1x512xi1> to vector<16x512xi1>
    %143 = vector.broadcast %cst_50 : f32 to vector<16x512xf32>
    %144 = arith.select %142, %140, %143 : vector<16x512xi1>, vector<16x512xf32>
    %145 = tpu.concatenate %139, %114, %144 in 0 : vector<16x512xf32>, vector<16x512xf32>, vector<16x512xf32> -> vector<48x512xf32>
    %c1_51 = arith.constant 1 : index
    %c0_52 = arith.constant 0 : index
    %c0_53 = arith.constant 0 : index
    %146 = vector.load %arg3[%c1_51, %c0_52, %c0_53] : memref<3x3x49xf32, #tpu.memory_space<vmem>>, vector<1x3x49xf32>
    %147 = vector.shape_cast %146 : vector<1x3x49xf32> to vector<3x49xf32>
    %148 = vector.extract_strided_slice %147 {offsets = [0, 0], sizes = [3, 48], strides = [1, 1]} : vector<3x49xf32> to vector<3x48xf32>
    %cst_54 = arith.constant dense<0.000000e+00> : vector<3x512xf32>
    %149 = tpu.matmul %148, %145, %cst_54 {dimension_numbers = #tpu.dot_dimension_numbers<[1], [0], [0], [1], [0, 0, 1, 1], [], []>} : vector<3x48xf32>, vector<48x512xf32>, vector<3x512xf32> -> vector<3x512xf32>
    %150 = vector.extract_strided_slice %147 {offsets = [0, 48], sizes = [3, 1], strides = [1, 1]} : vector<3x49xf32> to vector<3x1xf32>
    %151 = vector.broadcast %150 : vector<3x1xf32> to vector<3x512xf32>
    %152 = arith.addf %149, %151 : vector<3x512xf32>
    %153 = arith.addf %134, %152 : vector<3x512xf32>
    %c497_i32_55 = arith.constant 497 : i32
    %154 = tpu.dynamic_rotate %114 by %c497_i32_55 dim 1 : vector<16x512xf32>, i32 -> vector<16x512xf32>
    %cst_56 = arith.constant 0.000000e+00 : f32
    %155 = vector.shape_cast %48 : vector<1x512xi1> to vector<1x512xi1>
    %156 = vector.broadcast %155 : vector<1x512xi1> to vector<16x512xi1>
    %157 = vector.broadcast %cst_56 : f32 to vector<16x512xf32>
    %158 = arith.select %156, %154, %157 : vector<16x512xi1>, vector<16x512xf32>
    %c496_i32_57 = arith.constant 496 : i32
    %159 = tpu.dynamic_rotate %114 by %c496_i32_57 dim 1 : vector<16x512xf32>, i32 -> vector<16x512xf32>
    %cst_58 = arith.constant 0.000000e+00 : f32
    %160 = vector.shape_cast %45 : vector<1x512xi1> to vector<1x512xi1>
    %161 = vector.broadcast %160 : vector<1x512xi1> to vector<16x512xi1>
    %162 = vector.broadcast %cst_58 : f32 to vector<16x512xf32>
    %163 = arith.select %161, %159, %162 : vector<16x512xi1>, vector<16x512xf32>
    %c495_i32_59 = arith.constant 495 : i32
    %164 = tpu.dynamic_rotate %114 by %c495_i32_59 dim 1 : vector<16x512xf32>, i32 -> vector<16x512xf32>
    %cst_60 = arith.constant 0.000000e+00 : f32
    %165 = vector.shape_cast %49 : vector<1x512xi1> to vector<1x512xi1>
    %166 = vector.broadcast %165 : vector<1x512xi1> to vector<16x512xi1>
    %167 = vector.broadcast %cst_60 : f32 to vector<16x512xf32>
    %168 = arith.select %166, %164, %167 : vector<16x512xi1>, vector<16x512xf32>
    %169 = tpu.concatenate %158, %163, %168 in 0 : vector<16x512xf32>, vector<16x512xf32>, vector<16x512xf32> -> vector<48x512xf32>
    %c2_61 = arith.constant 2 : index
    %c0_62 = arith.constant 0 : index
    %c0_63 = arith.constant 0 : index
    %170 = vector.load %arg3[%c2_61, %c0_62, %c0_63] : memref<3x3x49xf32, #tpu.memory_space<vmem>>, vector<1x3x49xf32>
    %171 = vector.shape_cast %170 : vector<1x3x49xf32> to vector<3x49xf32>
    %172 = vector.extract_strided_slice %171 {offsets = [0, 0], sizes = [3, 48], strides = [1, 1]} : vector<3x49xf32> to vector<3x48xf32>
    %cst_64 = arith.constant dense<0.000000e+00> : vector<3x512xf32>
    %173 = tpu.matmul %172, %169, %cst_64 {dimension_numbers = #tpu.dot_dimension_numbers<[1], [0], [0], [1], [0, 0, 1, 1], [], []>} : vector<3x48xf32>, vector<48x512xf32>, vector<3x512xf32> -> vector<3x512xf32>
    %174 = arith.addf %153, %173 : vector<3x512xf32>
    %175 = vector.extract_strided_slice %174 {offsets = [0, 0], sizes = [3, 256], strides = [1, 1]} : vector<3x512xf32> to vector<3x256xf32>
    %c0_65 = arith.constant 0 : index
    %c0_66 = arith.constant 0 : index
    %c0_67 = arith.constant 0 : index
    %176 = vector.load %arg4[%c0_65, %c0_66, %c0_67] : memref<2x3x256xf32, #tpu.memory_space<vmem>>, vector<1x3x256xf32>
    %177 = vector.shape_cast %176 : vector<1x3x256xf32> to vector<3x256xf32>
    %178 = vector.shape_cast %175 : vector<3x256xf32> to vector<1x3x256xf32>
    tpu.vector_store %arg4[%c0_65, %c0_66, %c0_67], %178 {strides = array<i32>} : memref<2x3x256xf32, #tpu.memory_space<vmem>>, vector<1x3x256xf32>,
    %179 = vector.extract_strided_slice %174 {offsets = [0, 256], sizes = [3, 256], strides = [1, 1]} : vector<3x512xf32> to vector<3x256xf32>
    %c1_68 = arith.constant 1 : index
    %c0_69 = arith.constant 0 : index
    %c0_70 = arith.constant 0 : index
    %180 = vector.load %arg4[%c1_68, %c0_69, %c0_70] : memref<2x3x256xf32, #tpu.memory_space<vmem>>, vector<1x3x256xf32>
    %181 = vector.shape_cast %180 : vector<1x3x256xf32> to vector<3x256xf32>
    %182 = vector.shape_cast %179 : vector<3x256xf32> to vector<1x3x256xf32>
    tpu.vector_store %arg4[%c1_68, %c0_69, %c0_70], %182 {strides = array<i32>} : memref<2x3x256xf32, #tpu.memory_space<vmem>>, vector<1x3x256xf32>,
    return
  }
  func.func @transform_0(%arg0: i32) -> (i32, i32, i32) {
    %c0_i32 = arith.constant 0 : i32
    %c0_i32_0 = arith.constant 0 : i32
    %c0_i32_1 = arith.constant 0 : i32
    return %arg0, %c0_i32, %c0_i32_0 : i32, i32, i32
  }
  func.func @transform_1(%arg0: i32) -> (i32, i32, i32) {
    %c0_i32 = arith.constant 0 : i32
    %c0_i32_0 = arith.constant 0 : i32
    %c0_i32_1 = arith.constant 0 : i32
    %c0_i32_2 = arith.constant 0 : i32
    return %c0_i32, %c0_i32_0, %c0_i32_1 : i32, i32, i32
  }
  func.func @transform_2(%arg0: i32) -> (i32, i32, i32) {
    %c0_i32 = arith.constant 0 : i32
    %c0_i32_0 = arith.constant 0 : i32
    %c0_i32_1 = arith.constant 0 : i32
    %c0_i32_2 = arith.constant 0 : i32
    return %c0_i32, %c0_i32_0, %c0_i32_1 : i32, i32, i32
  }
  func.func @transform_3(%arg0: i32) -> (i32, i32, i32) {
    %c0_i32 = arith.constant 0 : i32
    %c0_i32_0 = arith.constant 0 : i32
    %c0_i32_1 = arith.constant 0 : i32
    return %arg0, %c0_i32, %c0_i32_0 : i32, i32, i32
  }
}

</mosaic_0001>

<llo_original>
// kernel: tpu_custom_call.1
$region0: #{tpu_custom_call.1}
  #allocation0 [shape = 'u32[]', space=smem, size = 0x4, offset = 0x4, fixed_abs, tag = 'smem constant byte address 0x4 - core index']
  #allocation1 [shape = 'u32[144,128]{1,0:T(1,128)}', space=vmem, size = 0x12000, scoped, tag = 'internal scratch']
  %s0 = inlined_call_operand.hbm [shape: f32[2,8,256], index: 0, kind: input, shape index: {}]
  %s1 = inlined_call_operand.hbm [shape: f32[3,16,25], index: 1, kind: input, shape index: {}]
  %s2 = inlined_call_operand.hbm [shape: f32[3,3,49], index: 2, kind: input, shape index: {}]
  %s3 = inlined_call_operand.vmem [shape: f32[2,3,256], index: 3, kind: output, shape index: {}]
  %s4 = sld [smem:[#allocation0]]
  $region34: #{tpu_custom_call.1} parent=0
    _
  %s6 = ssub.s32 1, %s4
  %s7 = scalar_select 0, %s6, %s4
  $region1: #{tpu_custom_call.1} parent=0
    #allocation2 [shape = 'u8[16384]{0}', space=vmem, size = 0x4000, scoped, tag = 'input window, operand 0, single buffered']
    #allocation3 [shape = 's32[1]{0}', space=sflag, size = 0x4, scoped, tag = 'scoped memory for tpu_custom_call.1']
    #allocation4 [shape = 'u8[24576]{0}', space=vmem, size = 0x6000, scoped, tag = 'input window, operand 1, single buffered']
    #allocation5 [shape = 's32[1]{0}', space=sflag, size = 0x4, scoped, tag = 'scoped memory for tpu_custom_call.1']
    #allocation6 [shape = 'u8[6144]{0}', space=vmem, size = 0x1800, scoped, tag = 'input window, operand 2, single buffered']
    %8 = vsyncpa [#allocation3], 0
    %9 = vsyncpa [#allocation5], 0
    // Predicated region
    $region2: #{tpu_custom_call.1} parent=1 // pred_check
      _
    $region3: #{tpu_custom_call.1} parent=1 // pred_check_branch
      %11 = sbr.rel (0) target = $region5
    $region4: #{tpu_custom_call.1} parent=1 // pred_region
      %s13 = ssub.s32 512, 512
      %14 = vsyncadd [#allocation3], %s13
      %s15 = sshll.u32 [#allocation2], 4
      %s16 = int_to_ptr.vmem [resolvable:$true] %s15
      %21 = dma.hbm_to_vmem [thread:$0]  %s0, 512, %s16, [#allocation3], 256, 256, 16
    $region5: #{tpu_custom_call.1} parent=1 // pred_fallthru
      _
    // Predicated region
    $region6: #{tpu_custom_call.1} parent=1 // pred_check
      _
    $region7: #{tpu_custom_call.1} parent=1 // pred_check_branch
      %23 = sbr.rel (0) target = $region9
    $region8: #{tpu_custom_call.1} parent=1 // pred_region
      %s25 = ssub.s32 768, 768
      %26 = vsyncadd [#allocation5], %s25
      %s27 = sshll.u32 [#allocation4], 4
      %s28 = int_to_ptr.vmem [resolvable:$true] %s27
      %33 = dma.hbm_to_vmem [thread:$0]  %s1, 768, %s28, [#allocation5], 128, 128, 8
    $region9: #{tpu_custom_call.1} parent=1 // pred_fallthru
      _
    // Predicated region
    $region10: #{tpu_custom_call.1} parent=1 // pred_check
      _
    $region11: #{tpu_custom_call.1} parent=1 // pred_check_branch
      %35 = sbr.rel (0) target = $region13
    $region12: #{tpu_custom_call.1} parent=1 // pred_region
      %s37 = ssub.s32 192, 192
      %38 = vsyncadd [#allocation5], %s37
      %s39 = sshll.u32 [#allocation6], 4
      %s40 = int_to_ptr.vmem [resolvable:$true] %s39
      %45 = dma.hbm_to_vmem [thread:$0]  %s2, 192, %s40, [#allocation5], 64, 64, 4
    $region13: #{tpu_custom_call.1} parent=1 // pred_fallthru
      _
    // Predicated region
    $region14: #{tpu_custom_call.1} parent=1 // pred_check
      _
    $region15: #{tpu_custom_call.1} parent=1 // pred_check_branch
      %47 = sbr.rel (0) target = $region17
    $region16: #{tpu_custom_call.1} parent=1 // pred_region
      %48 = dma.done [#allocation3], 512
    $region17: #{tpu_custom_call.1} parent=1 // pred_fallthru
      _
    // Predicated region
    $region18: #{tpu_custom_call.1} parent=1 // pred_check
      _
    $region19: #{tpu_custom_call.1} parent=1 // pred_check_branch
      %50 = sbr.rel (0) target = $region21
    $region20: #{tpu_custom_call.1} parent=1 // pred_region
      %51 = dma.done [#allocation5], 768
    $region21: #{tpu_custom_call.1} parent=1 // pred_fallthru
      _
    // Predicated region
    $region22: #{tpu_custom_call.1} parent=1 // pred_check
      _
    $region23: #{tpu_custom_call.1} parent=1 // pred_check_branch
      %53 = sbr.rel (0) target = $region25
    $region24: #{tpu_custom_call.1} parent=1 // pred_region
      %54 = dma.done [#allocation5], 192
    $region25: #{tpu_custom_call.1} parent=1 // pred_fallthru
      _
    %v55 = vld [vmem:[#allocation2] sm:$0xff]
    %v56 = vld [vmem:[#allocation2 + $0x8] sm:$0xff]
    %s57 = scalar_lea.vmem [#allocation2], 16
    %v58 = vld [vmem:[%s57] sm:$0xff]
    %v59 = vld [vmem:[%s57 + $0x8] sm:$0xff]
    %v60 = vlaneseq
    %v61 = vand.u32 %v60, 127
    %v62 = vadd.s32 %v61, 128
    %v63 = vadd.s32 %v61, 256
    %v64 = vadd.s32 %v61, 384
    %vm65 = vcmp.lt.s32.totalorder %v61, 0
    %v66 = vsub.s32 0, %v61
    %v67 = vsel %vm65, %v66, %v61
    %v68 = vshrl.u32 %v67, 4
    %v69 = vand.u32 %v67, 15
    %v70 = vsub.s32 0, %v69
    %v71 = vsel %vm65, %v70, %v69
    %vm72 = vcmp.lt.s32.totalorder %v62, 0
    %v73 = vsub.s32 0, %v62
    %v74 = vsel %vm72, %v73, %v62
    %v75 = vshrl.u32 %v74, 4
    %v76 = vand.u32 %v74, 15
    %v77 = vsub.s32 0, %v76
    %v78 = vsel %vm72, %v77, %v76
    %vm79 = vcmp.lt.s32.totalorder %v63, 0
    %v80 = vsub.s32 0, %v63
    %v81 = vsel %vm79, %v80, %v63
    %v82 = vshrl.u32 %v81, 4
    %v83 = vand.u32 %v81, 15
    %v84 = vsub.s32 0, %v83
    %v85 = vsel %vm79, %v84, %v83
    %vm86 = vcmp.lt.s32.totalorder %v64, 0
    %v87 = vsub.s32 0, %v64
    %v88 = vsel %vm86, %v87, %v64
    %v89 = vshrl.u32 %v88, 4
    %v90 = vand.u32 %v88, 15
    %v91 = vsub.s32 0, %v90
    %v92 = vsel %vm86, %v91, %v90
    %vm93 = vcmp.ne.s32.totalorder %v71, 0
    %vm94 = vcmp.ne.s32.totalorder %v78, 0
    %vm95 = vcmp.ne.s32.totalorder %v85, 0
    %vm96 = vcmp.ne.s32.totalorder %v92, 0
    %vm97 = vcmp.lt.s32.totalorder %v71, 0
    %vm98 = vcmp.lt.s32.totalorder %v78, 0
    %vm99 = vcmp.lt.s32.totalorder %v85, 0
    %vm100 = vcmp.lt.s32.totalorder %v92, 0
    %vm101 = vmand %vm97, %vm93
    %vm102 = vmand %vm98, %vm94
    %vm103 = vmand %vm99, %vm95
    %vm104 = vmand %vm100, %vm96
    %v105 = vadd.s32 %v71, 16
    %v106 = vadd.s32 %v78, 16
    %v107 = vadd.s32 %v85, 16
    %v108 = vadd.s32 %v92, 16
    %v109 = vsel %vm101, %v105, %v71
    %v110 = vsel %vm102, %v106, %v78
    %v111 = vsel %vm103, %v107, %v85
    %v112 = vsel %vm104, %v108, %v92
    %vm113 = vcmp.lt.s32.totalorder %v61, 0
    %v114 = vsub.s32 0, %v61
    %v115 = vsel %vm113, %v114, %v61
    %v116 = vshrl.u32 %v115, 8
    %v117 = vand.u32 %v115, 255
    %v118 = vsub.s32 0, %v117
    %v119 = vsel %vm113, %v118, %v117
    %vm120 = vcmp.lt.s32.totalorder %v62, 0
    %v121 = vsub.s32 0, %v62
    %v122 = vsel %vm120, %v121, %v62
    %v123 = vshrl.u32 %v122, 8
    %v124 = vand.u32 %v122, 255
    %v125 = vsub.s32 0, %v124
    %v126 = vsel %vm120, %v125, %v124
    %vm127 = vcmp.lt.s32.totalorder %v63, 0
    %v128 = vsub.s32 0, %v63
    %v129 = vsel %vm127, %v128, %v63
    %v130 = vshrl.u32 %v129, 8
    %v131 = vand.u32 %v129, 255
    %v132 = vsub.s32 0, %v131
    %v133 = vsel %vm127, %v132, %v131
    %vm134 = vcmp.lt.s32.totalorder %v64, 0
    %v135 = vsub.s32 0, %v64
    %v136 = vsel %vm134, %v135, %v64
    %v137 = vshrl.u32 %v136, 8
    %v138 = vand.u32 %v136, 255
    %v139 = vsub.s32 0, %v138
    %v140 = vsel %vm134, %v139, %v138
    %vm141 = vcmp.ne.s32.totalorder %v119, 0
    %vm142 = vcmp.ne.s32.totalorder %v126, 0
    %vm143 = vcmp.ne.s32.totalorder %v133, 0
    %vm144 = vcmp.ne.s32.totalorder %v140, 0
    %vm145 = vcmp.lt.s32.totalorder %v119, 0
    %vm146 = vcmp.lt.s32.totalorder %v126, 0
    %vm147 = vcmp.lt.s32.totalorder %v133, 0
    %vm148 = vcmp.lt.s32.totalorder %v140, 0
    %vm149 = vmand %vm145, %vm141
    %vm150 = vmand %vm146, %vm142
    %vm151 = vmand %vm147, %vm143
    %vm152 = vmand %vm148, %vm144
    %v153 = vadd.s32 %v119, 256
    %v154 = vadd.s32 %v126, 256
    %v155 = vadd.s32 %v133, 256
    %v156 = vadd.s32 %v140, 256
    %v157 = vsel %vm149, %v153, %v119
    %v158 = vsel %vm150, %v154, %v126
    %v159 = vsel %vm151, %v155, %v133
    %v160 = vsel %vm152, %v156, %v140
    %vm161 = vcmp.ge.s32.totalorder %v109, 1
    %vm162 = vcmp.ge.s32.totalorder %v110, 1
    %vm163 = vcmp.ge.s32.totalorder %v111, 1
    %vm164 = vcmp.ge.s32.totalorder %v112, 1
    %vm165 = vcmp.lt.s32.totalorder %v109, 15
    %vm166 = vcmp.lt.s32.totalorder %v110, 15
    %vm167 = vcmp.lt.s32.totalorder %v111, 15
    %vm168 = vcmp.lt.s32.totalorder %v112, 15
    %vm169 = vcmp.ge.s32.totalorder %v157, 16
    %vm170 = vcmp.ge.s32.totalorder %v158, 16
    %vm171 = vcmp.ge.s32.totalorder %v159, 16
    %vm172 = vcmp.ge.s32.totalorder %v160, 16
    %vm173 = vcmp.lt.s32.totalorder %v157, 240
    %vm174 = vcmp.lt.s32.totalorder %v158, 240
    %vm175 = vcmp.lt.s32.totalorder %v159, 240
    %vm176 = vcmp.lt.s32.totalorder %v160, 240
    %vm177 = vmand %vm169, %vm161
    %vm178 = vmand %vm170, %vm162
    %vm179 = vmand %vm171, %vm163
    %vm180 = vmand %vm172, %vm164
    %vm181 = vmand %vm169, %vm165
    %vm182 = vmand %vm170, %vm166
    %vm183 = vmand %vm171, %vm167
    %vm184 = vmand %vm172, %vm168
    %vm185 = vmand %vm173, %vm161
    %vm186 = vmand %vm174, %vm162
    %vm187 = vmand %vm175, %vm163
    %vm188 = vmand %vm176, %vm164
    %vm189 = vmand %vm173, %vm165
    %vm190 = vmand %vm174, %vm166
    %vm191 = vmand %vm175, %vm167
    %vm192 = vmand %vm176, %vm168
    %193 = vrot.lane.b32.xlu0 %v55, 17
    %v194 = vpop.permute.xlu0 %193
    %195 = vrot.lane.b32.xlu0 %v56, 17
    %v196 = vpop.permute.xlu0 %195
    %197 = vrot.lane.b32.xlu0 %v58, 17
    %v198 = vpop.permute.xlu0 %197
    %199 = vrot.lane.b32.xlu0 %v59, 17
    %v200 = vpop.permute.xlu0 %199
    %vm201 = vcmp.lt.s32.totalorder %v61, 17
    %v202 = vsel %vm201, %v198, %v200
    %v203 = vsel %vm201, %v196, %v198
    %v204 = vsel %vm201, %v194, %v196
    %v205 = vsel %vm201, %v200, %v194
    %v206 = vsel %vm177, 1, 0
    %v207 = vsel %vm178, 1, 0
    %v208 = vsel %vm179, 1, 0
    %v209 = vsel %vm180, 1, 0
    %vm210 = vcmp.eq.s32.totalorder %v206, 1
    %vm211 = vcmp.eq.s32.totalorder %v207, 1
    %vm212 = vcmp.eq.s32.totalorder %v208, 1
    %vm213 = vcmp.eq.s32.totalorder %v209, 1
    %v214 = vsel %vm210, %v205, 0.0
    %v215 = vsel %vm211, %v204, 0.0
    %v216 = vsel %vm212, %v203, 0.0
    %v217 = vsel %vm213, %v202, 0.0
    %218 = vrot.lane.b32.xlu0 %v55, 16
    %v219 = vpop.permute.xlu0 %218
    %220 = vrot.lane.b32.xlu0 %v56, 16
    %v221 = vpop.permute.xlu0 %220
    %222 = vrot.lane.b32.xlu0 %v58, 16
    %v223 = vpop.permute.xlu0 %222
    %224 = vrot.lane.b32.xlu0 %v59, 16
    %v225 = vpop.permute.xlu0 %224
    %vm226 = vcmp.lt.s32.totalorder %v61, 16
    %v227 = vsel %vm226, %v223, %v225
    %v228 = vsel %vm226, %v221, %v223
    %v229 = vsel %vm226, %v219, %v221
    %v230 = vsel %vm226, %v225, %v219
    %v231 = vsel %vm169, 1, 0
    %v232 = vsel %vm170, 1, 0
    %v233 = vsel %vm171, 1, 0
    %v234 = vsel %vm172, 1, 0
    %vm235 = vcmp.eq.s32.totalorder %v231, 1
    %vm236 = vcmp.eq.s32.totalorder %v232, 1
    %vm237 = vcmp.eq.s32.totalorder %v233, 1
    %vm238 = vcmp.eq.s32.totalorder %v234, 1
    %v239 = vsel %vm235, %v230, 0.0
    %v240 = vsel %vm236, %v229, 0.0
    %v241 = vsel %vm237, %v228, 0.0
    %v242 = vsel %vm238, %v227, 0.0
    %243 = vrot.lane.b32.xlu0 %v55, 15
    %v244 = vpop.permute.xlu0 %243
    %245 = vrot.lane.b32.xlu0 %v56, 15
    %v246 = vpop.permute.xlu0 %245
    %247 = vrot.lane.b32.xlu0 %v58, 15
    %v248 = vpop.permute.xlu0 %247
    %249 = vrot.lane.b32.xlu0 %v59, 15
    %v250 = vpop.permute.xlu0 %249
    %vm251 = vcmp.lt.s32.totalorder %v61, 15
    %v252 = vsel %vm251, %v248, %v250
    %v253 = vsel %vm251, %v246, %v248
    %v254 = vsel %vm251, %v244, %v246
    %v255 = vsel %vm251, %v250, %v244
    %v256 = vsel %vm181, 1, 0
    %v257 = vsel %vm182, 1, 0
    %v258 = vsel %vm183, 1, 0
    %v259 = vsel %vm184, 1, 0
    %vm260 = vcmp.eq.s32.totalorder %v256, 1
    %vm261 = vcmp.eq.s32.totalorder %v257, 1
    %vm262 = vcmp.eq.s32.totalorder %v258, 1
    %vm263 = vcmp.eq.s32.totalorder %v259, 1
    %v264 = vsel %vm260, %v255, 0.0
    %v265 = vsel %vm261, %v254, 0.0
    %v266 = vsel %vm262, %v253, 0.0
    %v267 = vsel %vm263, %v252, 0.0
    %v268 = vld [vmem:[#allocation4] sm:$0xff]
    %v269 = vld [vmem:[#allocation4 + $0x8] sm:$0xff]
    %270 = vrot.lane.b32.xlu0 %v55, 1
    %v271 = vpop.permute.xlu0 %270
    %272 = vrot.lane.b32.xlu0 %v56, 1
    %v273 = vpop.permute.xlu0 %272
    %274 = vrot.lane.b32.xlu0 %v58, 1
    %v275 = vpop.permute.xlu0 %274
    %276 = vrot.lane.b32.xlu0 %v59, 1
    %v277 = vpop.permute.xlu0 %276
    %vm278 = vcmp.lt.s32.totalorder %v61, 1
    %v279 = vsel %vm278, %v275, %v277
    %v280 = vsel %vm278, %v273, %v275
    %v281 = vsel %vm278, %v271, %v273
    %v282 = vsel %vm278, %v277, %v271
    %v283 = vsel %vm161, 1, 0
    %v284 = vsel %vm162, 1, 0
    %v285 = vsel %vm163, 1, 0
    %v286 = vsel %vm164, 1, 0
    %vm287 = vcmp.eq.s32.totalorder %v283, 1
    %vm288 = vcmp.eq.s32.totalorder %v284, 1
    %vm289 = vcmp.eq.s32.totalorder %v285, 1
    %vm290 = vcmp.eq.s32.totalorder %v286, 1
    %v291 = vsel %vm287, %v282, 0.0
    %v292 = vsel %vm288, %v281, 0.0
    %v293 = vsel %vm289, %v280, 0.0
    %v294 = vsel %vm290, %v279, 0.0
    %295 = vrot.lane.b32.xlu0 %v55, 127
    %v296 = vpop.permute.xlu0 %295
    %297 = vrot.lane.b32.xlu0 %v56, 127
    %v298 = vpop.permute.xlu0 %297
    %299 = vrot.lane.b32.xlu0 %v58, 127
    %v300 = vpop.permute.xlu0 %299
    %301 = vrot.lane.b32.xlu0 %v59, 127
    %v302 = vpop.permute.xlu0 %301
    %vm303 = vcmp.lt.s32.totalorder %v61, 127
    %v304 = vsel %vm303, %v300, %v302
    %v305 = vsel %vm303, %v298, %v300
    %v306 = vsel %vm303, %v296, %v298
    %v307 = vsel %vm303, %v302, %v296
    %v308 = vsel %vm165, 1, 0
    %v309 = vsel %vm166, 1, 0
    %v310 = vsel %vm167, 1, 0
    %v311 = vsel %vm168, 1, 0
    %vm312 = vcmp.eq.s32.totalorder %v308, 1
    %vm313 = vcmp.eq.s32.totalorder %v309, 1
    %vm314 = vcmp.eq.s32.totalorder %v310, 1
    %vm315 = vcmp.eq.s32.totalorder %v311, 1
    %v316 = vsel %vm312, %v306, 0.0
    %v317 = vsel %vm313, %v305, 0.0
    %v318 = vsel %vm314, %v304, 0.0
    %v319 = vsel %vm315, %v307, 0.0
    %s320 = scalar_lea.vmem [#allocation4], 16
    %v321 = vld [vmem:[%s320] sm:$0xff]
    %v322 = vld [vmem:[%s320 + $0x8] sm:$0xff]
    %324 = vset.pattern.permute.xlu0 24
    %325 = vperm.xlu0 %324, %v321
    %v326 = vpop.permute.xlu0 %325
    %329 = vset.pattern.permute.xlu0 24
    %330 = vperm.xlu0 %329, %v322
    %v331 = vpop.permute.xlu0 %330
    %vm333 = vcmask 195584
    %v334 = vsel %vm333, %v321, 0
    %v336 = vsel %vm333, %v322, 0
    %338 = vmatprep.subr.mxu0 %v292
    %339 = vmatpush1.msra.mxu0 %v291
    %340 = vmatprep.subr.mxu0 %v56
    %341 = vmatpush1.msra.mxu0 %v55
    %342 = vmatprep.subr.mxu0 %v317
    %343 = vmatpush1.msra.mxu0 %v316
    %344 = vmatprep.subr.mxu0 0.0
    %345 = vmatpush1.msra.mxu0 0.0
    %346 = vmatprep.subr.mxu0 0.0
    %347 = vmatpush1.msra.mxu0 0.0
    %348 = vmatprep.subr.mxu0 0.0
    %349 = vmatpush1.msra.mxu0 0.0
    %350 = vmatprep.subr.mxu0 0.0
    %351 = vmatpush1.msra.mxu0 0.0
    %352 = vmatprep.subr.mxu0 0.0
    %353 = vmatpush1.msra.mxu0 0.0
    %354 = vmatprep.subr.mxu0 0.0
    %355 = vmatpush1.msra.mxu0 0.0
    %356 = vmatprep.subr.mxu0 0.0
    %357 = vmatpush1.msra.mxu0 0.0
    %358 = vmatprep.subr.mxu0 0.0
    %359 = vmatpush1.msra.mxu0 0.0
    %360 = vmatprep.subr.mxu0 0.0
    %361 = vmatpush1.msra.mxu0 0.0
    %362 = vmatprep.subr.mxu0 0.0
    %363 = vmatpush1.msra.mxu0 0.0
    %364 = vmatprep.subr.mxu0 0.0
    %365 = vmatpush1.msra.mxu0 0.0
    %366 = vmatprep.subr.mxu0 0.0
    %367 = vmatpush1.msra.mxu0 0.0
    %368 = vmatprep.subr.mxu0 0.0
    %369 = vmatpush1.msra.mxu0 0.0
    %370 = vmatprep.subr.mxu0 0.0
    %371 = vmatpush1.msra.mxu0 0.0
    %372 = vmatprep.subr.mxu0 0.0
    %373 = vmatpush1.msra.mxu0 0.0
    %374 = vmatprep.subr.mxu0 0.0
    %375 = vmatpush1.msra.mxu0 0.0
    %376 = vmatprep.subr.mxu0 0.0
    %377 = vmatpush1.msra.mxu0 0.0
    %378 = vmatprep.subr.mxu0 0.0
    %379 = vmatpush1.msra.mxu0 0.0
    %380 = vmatprep.subr.mxu0 0.0
    %381 = vmatpush1.msra.mxu0 0.0
    %382 = vmatprep.subr.mxu0 0.0
    %383 = vmatpush1.msra.mxu0 0.0
    %384 = vmatprep.subr.mxu0 0.0
    %385 = vmatpush1.msra.mxu0 0.0
    %386 = vmatprep.subr.mxu0 0.0
    %387 = vmatpush1.msra.mxu0 0.0
    %388 = vmatprep.subr.mxu0 0.0
    %389 = vmatpush1.msra.mxu0 0.0
    %390 = vmatprep.subr.mxu0 0.0
    %391 = vmatpush1.msra.mxu0 0.0
    %392 = vmatprep.subr.mxu0 0.0
    %393 = vmatpush1.msra.mxu0 0.0
    %394 = vmatprep.subr.mxu0 0.0
    %395 = vmatpush1.msra.mxu0 0.0
    %396 = vmatprep.subr.mxu0 0.0
    %397 = vmatpush1.msra.mxu0 0.0
    %398 = vmatprep.subr.mxu0 0.0
    %399 = vmatpush1.msra.mxu0 0.0
    %400 = vmatprep.subr.mxu0 0.0
    %401 = vmatpush1.msra.mxu0 0.0
    %402 = vmatprep.mubr.f32.mxu0 0.0
    %403 = vmatmul.mubr.f32.gmra.mrb[0].mxu0 %v334
    %v404 = vpop.f32.mrb[0].mxu0
    %v405 = vadd.f32 %v326, %v404
    %v406 = vpop.f32.mrb[0].mxu0
    %v407 = vadd.f32 %v326, %v406
    %408 = vmatprep.mubr.f32.mxu0 0.0
    %409 = vmatmul.mubr.f32.gmra.mrb[0].mxu0 %v336
    %v410 = vpop.f32.mrb[0].mxu0
    %v411 = vadd.f32 %v331, %v410
    %v412 = vpop.f32.mrb[0].mxu0
    %v413 = vadd.f32 %v331, %v412
    %414 = vdwg.mxu0
    %415 = vmatprep.subr.mxu0 %v294
    %416 = vmatpush1.msra.mxu0 %v293
    %417 = vmatprep.subr.mxu0 %v59
    %418 = vmatpush1.msra.mxu0 %v58
    %419 = vmatprep.subr.mxu0 %v319
    %420 = vmatpush1.msra.mxu0 %v318
    %421 = vmatprep.subr.mxu0 0.0
    %422 = vmatpush1.msra.mxu0 0.0
    %423 = vmatprep.subr.mxu0 0.0
    %424 = vmatpush1.msra.mxu0 0.0
    %425 = vmatprep.subr.mxu0 0.0
    %426 = vmatpush1.msra.mxu0 0.0
    %427 = vmatprep.subr.mxu0 0.0
    %428 = vmatpush1.msra.mxu0 0.0
    %429 = vmatprep.subr.mxu0 0.0
    %430 = vmatpush1.msra.mxu0 0.0
    %431 = vmatprep.subr.mxu0 0.0
    %432 = vmatpush1.msra.mxu0 0.0
    %433 = vmatprep.subr.mxu0 0.0
    %434 = vmatpush1.msra.mxu0 0.0
    %435 = vmatprep.subr.mxu0 0.0
    %436 = vmatpush1.msra.mxu0 0.0
    %437 = vmatprep.subr.mxu0 0.0
    %438 = vmatpush1.msra.mxu0 0.0
    %439 = vmatprep.subr.mxu0 0.0
    %440 = vmatpush1.msra.mxu0 0.0
    %441 = vmatprep.subr.mxu0 0.0
    %442 = vmatpush1.msra.mxu0 0.0
    %443 = vmatprep.subr.mxu0 0.0
    %444 = vmatpush1.msra.mxu0 0.0
    %445 = vmatprep.subr.mxu0 0.0
    %446 = vmatpush1.msra.mxu0 0.0
    %447 = vmatprep.subr.mxu0 0.0
    %448 = vmatpush1.msra.mxu0 0.0
    %449 = vmatprep.subr.mxu0 0.0
    %450 = vmatpush1.msra.mxu0 0.0
    %451 = vmatprep.subr.mxu0 0.0
    %452 = vmatpush1.msra.mxu0 0.0
    %453 = vmatprep.subr.mxu0 0.0
    %454 = vmatpush1.msra.mxu0 0.0
    %455 = vmatprep.subr.mxu0 0.0
    %456 = vmatpush1.msra.mxu0 0.0
    %457 = vmatprep.subr.mxu0 0.0
    %458 = vmatpush1.msra.mxu0 0.0
    %459 = vmatprep.subr.mxu0 0.0
    %460 = vmatpush1.msra.mxu0 0.0
    %461 = vmatprep.subr.mxu0 0.0
    %462 = vmatpush1.msra.mxu0 0.0
    %463 = vmatprep.subr.mxu0 0.0
    %464 = vmatpush1.msra.mxu0 0.0
    %465 = vmatprep.subr.mxu0 0.0
    %466 = vmatpush1.msra.mxu0 0.0
    %467 = vmatprep.subr.mxu0 0.0
    %468 = vmatpush1.msra.mxu0 0.0
    %469 = vmatprep.subr.mxu0 0.0
    %470 = vmatpush1.msra.mxu0 0.0
    %471 = vmatprep.subr.mxu0 0.0
    %472 = vmatpush1.msra.mxu0 0.0
    %473 = vmatprep.subr.mxu0 0.0
    %474 = vmatpush1.msra.mxu0 0.0
    %475 = vmatprep.subr.mxu0 0.0
    %476 = vmatpush1.msra.mxu0 0.0
    %477 = vmatprep.subr.mxu0 0.0
    %478 = vmatpush1.msra.mxu0 0.0
    %479 = vmatprep.mubr.f32.mxu0 0.0
    %480 = vmatmul.mubr.f32.gmra.mrb[0].mxu0 %v334
    %v481 = vpop.f32.mrb[0].mxu0
    %v482 = vadd.f32 %v326, %v481
    %v483 = vpop.f32.mrb[0].mxu0
    %v484 = vadd.f32 %v326, %v483
    %485 = vmatprep.mubr.f32.mxu0 0.0
    %486 = vmatmul.mubr.f32.gmra.mrb[0].mxu0 %v336
    %v487 = vpop.f32.mrb[0].mxu0
    %v488 = vadd.f32 %v331, %v487
    %v489 = vpop.f32.mrb[0].mxu0
    %v490 = vadd.f32 %v331, %v489
    %491 = vdwg.mxu0
    %v493 = vsel %vm333, %v268, 0
    %v496 = vsel %vm333, %v269, 0
    %498 = vmatprep.subr.mxu0 %v215
    %499 = vmatpush1.msra.mxu0 %v214
    %500 = vmatprep.subr.mxu0 %v240
    %501 = vmatpush1.msra.mxu0 %v239
    %502 = vmatprep.subr.mxu0 %v265
    %503 = vmatpush1.msra.mxu0 %v264
    %504 = vmatprep.subr.mxu0 0.0
    %505 = vmatpush1.msra.mxu0 0.0
    %506 = vmatprep.subr.mxu0 0.0
    %507 = vmatpush1.msra.mxu0 0.0
    %508 = vmatprep.subr.mxu0 0.0
    %509 = vmatpush1.msra.mxu0 0.0
    %510 = vmatprep.subr.mxu0 0.0
    %511 = vmatpush1.msra.mxu0 0.0
    %512 = vmatprep.subr.mxu0 0.0
    %513 = vmatpush1.msra.mxu0 0.0
    %514 = vmatprep.subr.mxu0 0.0
    %515 = vmatpush1.msra.mxu0 0.0
    %516 = vmatprep.subr.mxu0 0.0
    %517 = vmatpush1.msra.mxu0 0.0
    %518 = vmatprep.subr.mxu0 0.0
    %519 = vmatpush1.msra.mxu0 0.0
    %520 = vmatprep.subr.mxu0 0.0
    %521 = vmatpush1.msra.mxu0 0.0
    %522 = vmatprep.subr.mxu0 0.0
    %523 = vmatpush1.msra.mxu0 0.0
    %524 = vmatprep.subr.mxu0 0.0
    %525 = vmatpush1.msra.mxu0 0.0
    %526 = vmatprep.subr.mxu0 0.0
    %527 = vmatpush1.msra.mxu0 0.0
    %528 = vmatprep.subr.mxu0 0.0
    %529 = vmatpush1.msra.mxu0 0.0
    %530 = vmatprep.subr.mxu0 0.0
    %531 = vmatpush1.msra.mxu0 0.0
    %532 = vmatprep.subr.mxu0 0.0
    %533 = vmatpush1.msra.mxu0 0.0
    %534 = vmatprep.subr.mxu0 0.0
    %535 = vmatpush1.msra.mxu0 0.0
    %536 = vmatprep.subr.mxu0 0.0
    %537 = vmatpush1.msra.mxu0 0.0
    %538 = vmatprep.subr.mxu0 0.0
    %539 = vmatpush1.msra.mxu0 0.0
    %540 = vmatprep.subr.mxu0 0.0
    %541 = vmatpush1.msra.mxu0 0.0
    %542 = vmatprep.subr.mxu0 0.0
    %543 = vmatpush1.msra.mxu0 0.0
    %544 = vmatprep.subr.mxu0 0.0
    %545 = vmatpush1.msra.mxu0 0.0
    %546 = vmatprep.subr.mxu0 0.0
    %547 = vmatpush1.msra.mxu0 0.0
    %548 = vmatprep.subr.mxu0 0.0
    %549 = vmatpush1.msra.mxu0 0.0
    %550 = vmatprep.subr.mxu0 0.0
    %551 = vmatpush1.msra.mxu0 0.0
    %552 = vmatprep.subr.mxu0 0.0
    %553 = vmatpush1.msra.mxu0 0.0
    %554 = vmatprep.subr.mxu0 0.0
    %555 = vmatpush1.msra.mxu0 0.0
    %556 = vmatprep.subr.mxu0 0.0
    %557 = vmatpush1.msra.mxu0 0.0
    %558 = vmatprep.subr.mxu0 0.0
    %559 = vmatpush1.msra.mxu0 0.0
    %560 = vmatprep.subr.mxu0 0.0
    %561 = vmatpush1.msra.mxu0 0.0
    %562 = vmatprep.mubr.f32.mxu0 0.0
    %563 = vmatmul.mubr.f32.gmra.mrb[0].mxu0 %v493
    %v564 = vpop.f32.mrb[0].mxu0
    %v565 = vadd.f32 %v405, %v564
    %v566 = vpop.f32.mrb[0].mxu0
    %v567 = vadd.f32 %v407, %v566
    %568 = vmatprep.mubr.f32.mxu0 0.0
    %569 = vmatmul.mubr.f32.gmra.mrb[0].mxu0 %v496
    %v570 = vpop.f32.mrb[0].mxu0
    %v571 = vadd.f32 %v411, %v570
    %v572 = vpop.f32.mrb[0].mxu0
    %v573 = vadd.f32 %v413, %v572
    %574 = vdwg.mxu0
    %575 = vmatprep.subr.mxu0 %v217
    %576 = vmatpush1.msra.mxu0 %v216
    %577 = vmatprep.subr.mxu0 %v242
    %578 = vmatpush1.msra.mxu0 %v241
    %579 = vmatprep.subr.mxu0 %v267
    %580 = vmatpush1.msra.mxu0 %v266
    %581 = vmatprep.subr.mxu0 0.0
    %582 = vmatpush1.msra.mxu0 0.0
    %583 = vmatprep.subr.mxu0 0.0
    %584 = vmatpush1.msra.mxu0 0.0
    %585 = vmatprep.subr.mxu0 0.0
    %586 = vmatpush1.msra.mxu0 0.0
    %587 = vmatprep.subr.mxu0 0.0
    %588 = vmatpush1.msra.mxu0 0.0
    %589 = vmatprep.subr.mxu0 0.0
    %590 = vmatpush1.msra.mxu0 0.0
    %591 = vmatprep.subr.mxu0 0.0
    %592 = vmatpush1.msra.mxu0 0.0
    %593 = vmatprep.subr.mxu0 0.0
    %594 = vmatpush1.msra.mxu0 0.0
    %595 = vmatprep.subr.mxu0 0.0
    %596 = vmatpush1.msra.mxu0 0.0
    %597 = vmatprep.subr.mxu0 0.0
    %598 = vmatpush1.msra.mxu0 0.0
    %599 = vmatprep.subr.mxu0 0.0
    %600 = vmatpush1.msra.mxu0 0.0
    %601 = vmatprep.subr.mxu0 0.0
    %602 = vmatpush1.msra.mxu0 0.0
    %603 = vmatprep.subr.mxu0 0.0
    %604 = vmatpush1.msra.mxu0 0.0
    %605 = vmatprep.subr.mxu0 0.0
    %606 = vmatpush1.msra.mxu0 0.0
    %607 = vmatprep.subr.mxu0 0.0
    %608 = vmatpush1.msra.mxu0 0.0
    %609 = vmatprep.subr.mxu0 0.0
    %610 = vmatpush1.msra.mxu0 0.0
    %611 = vmatprep.subr.mxu0 0.0
    %612 = vmatpush1.msra.mxu0 0.0
    %613 = vmatprep.subr.mxu0 0.0
    %614 = vmatpush1.msra.mxu0 0.0
    %615 = vmatprep.subr.mxu0 0.0
    %616 = vmatpush1.msra.mxu0 0.0
    %617 = vmatprep.subr.mxu0 0.0
    %618 = vmatpush1.msra.mxu0 0.0
    %619 = vmatprep.subr.mxu0 0.0
    %620 = vmatpush1.msra.mxu0 0.0
    %621 = vmatprep.subr.mxu0 0.0
    %622 = vmatpush1.msra.mxu0 0.0
    %623 = vmatprep.subr.mxu0 0.0
    %624 = vmatpush1.msra.mxu0 0.0
    %625 = vmatprep.subr.mxu0 0.0
    %626 = vmatpush1.msra.mxu0 0.0
    %627 = vmatprep.subr.mxu0 0.0
    %628 = vmatpush1.msra.mxu0 0.0
    %629 = vmatprep.subr.mxu0 0.0
    %630 = vmatpush1.msra.mxu0 0.0
    %631 = vmatprep.subr.mxu0 0.0
    %632 = vmatpush1.msra.mxu0 0.0
    %633 = vmatprep.subr.mxu0 0.0
    %634 = vmatpush1.msra.mxu0 0.0
    %635 = vmatprep.subr.mxu0 0.0
    %636 = vmatpush1.msra.mxu0 0.0
    %637 = vmatprep.subr.mxu0 0.0
    %638 = vmatpush1.msra.mxu0 0.0
    %639 = vmatprep.mubr.f32.mxu0 0.0
    %640 = vmatmul.mubr.f32.gmra.mrb[0].mxu0 %v493
    %v641 = vpop.f32.mrb[0].mxu0
    %v642 = vadd.f32 %v482, %v641
    %v643 = vpop.f32.mrb[0].mxu0
    %v644 = vadd.f32 %v484, %v643
    %645 = vmatprep.mubr.f32.mxu0 0.0
    %646 = vmatmul.mubr.f32.gmra.mrb[0].mxu0 %v496
    %v647 = vpop.f32.mrb[0].mxu0
    %v648 = vadd.f32 %v488, %v647
    %v649 = vpop.f32.mrb[0].mxu0
    %v650 = vadd.f32 %v490, %v649
    %651 = vdwg.mxu0
    %652 = vrot.lane.b32.xlu0 %v55, 113
    %v653 = vpop.permute.xlu0 %652
    %654 = vrot.lane.b32.xlu0 %v56, 113
    %v655 = vpop.permute.xlu0 %654
    %656 = vrot.lane.b32.xlu0 %v58, 113
    %v657 = vpop.permute.xlu0 %656
    %658 = vrot.lane.b32.xlu0 %v59, 113
    %v659 = vpop.permute.xlu0 %658
    %vm660 = vcmp.lt.s32.totalorder %v61, 113
    %v661 = vsel %vm660, %v657, %v659
    %v662 = vsel %vm660, %v655, %v657
    %v663 = vsel %vm660, %v653, %v655
    %v664 = vsel %vm660, %v659, %v653
    %v665 = vsel %vm185, 1, 0
    %v666 = vsel %vm186, 1, 0
    %v667 = vsel %vm187, 1, 0
    %v668 = vsel %vm188, 1, 0
    %vm669 = vcmp.eq.s32.totalorder %v665, 1
    %vm670 = vcmp.eq.s32.totalorder %v666, 1
    %vm671 = vcmp.eq.s32.totalorder %v667, 1
    %vm672 = vcmp.eq.s32.totalorder %v668, 1
    %v673 = vsel %vm669, %v663, 0.0
    %v674 = vsel %vm670, %v662, 0.0
    %v675 = vsel %vm671, %v661, 0.0
    %v676 = vsel %vm672, %v664, 0.0
    %677 = vrot.lane.b32.xlu0 %v55, 112
    %v678 = vpop.permute.xlu0 %677
    %679 = vrot.lane.b32.xlu0 %v56, 112
    %v680 = vpop.permute.xlu0 %679
    %681 = vrot.lane.b32.xlu0 %v58, 112
    %v682 = vpop.permute.xlu0 %681
    %683 = vrot.lane.b32.xlu0 %v59, 112
    %v684 = vpop.permute.xlu0 %683
    %vm685 = vcmp.lt.s32.totalorder %v61, 112
    %v686 = vsel %vm685, %v682, %v684
    %v687 = vsel %vm685, %v680, %v682
    %v688 = vsel %vm685, %v678, %v680
    %v689 = vsel %vm685, %v684, %v678
    %v690 = vsel %vm173, 1, 0
    %v691 = vsel %vm174, 1, 0
    %v692 = vsel %vm175, 1, 0
    %v693 = vsel %vm176, 1, 0
    %vm694 = vcmp.eq.s32.totalorder %v690, 1
    %vm695 = vcmp.eq.s32.totalorder %v691, 1
    %vm696 = vcmp.eq.s32.totalorder %v692, 1
    %vm697 = vcmp.eq.s32.totalorder %v693, 1
    %v698 = vsel %vm694, %v688, 0.0
    %v699 = vsel %vm695, %v687, 0.0
    %v700 = vsel %vm696, %v686, 0.0
    %v701 = vsel %vm697, %v689, 0.0
    %702 = vrot.lane.b32.xlu0 %v55, 111
    %v703 = vpop.permute.xlu0 %702
    %704 = vrot.lane.b32.xlu0 %v56, 111
    %v705 = vpop.permute.xlu0 %704
    %706 = vrot.lane.b32.xlu0 %v58, 111
    %v707 = vpop.permute.xlu0 %706
    %708 = vrot.lane.b32.xlu0 %v59, 111
    %v709 = vpop.permute.xlu0 %708
    %vm710 = vcmp.lt.s32.totalorder %v61, 111
    %v711 = vsel %vm710, %v707, %v709
    %v712 = vsel %vm710, %v705, %v707
    %v713 = vsel %vm710, %v703, %v705
    %v714 = vsel %vm710, %v709, %v703
    %v715 = vsel %vm189, 1, 0
    %v716 = vsel %vm190, 1, 0
    %v717 = vsel %vm191, 1, 0
    %v718 = vsel %vm192, 1, 0
    %vm719 = vcmp.eq.s32.totalorder %v715, 1
    %vm720 = vcmp.eq.s32.totalorder %v716, 1
    %vm721 = vcmp.eq.s32.totalorder %v717, 1
    %vm722 = vcmp.eq.s32.totalorder %v718, 1
    %v723 = vsel %vm719, %v713, 0.0
    %v724 = vsel %vm720, %v712, 0.0
    %v725 = vsel %vm721, %v711, 0.0
    %v726 = vsel %vm722, %v714, 0.0
    %s727 = scalar_lea.vmem [#allocation4], 32
    %v728 = vld [vmem:[%s727] sm:$0xff]
    %v729 = vld [vmem:[%s727 + $0x8] sm:$0xff]
    %v731 = vsel %vm333, %v728, 0
    %v734 = vsel %vm333, %v729, 0
    %736 = vmatprep.subr.mxu0 %v674
    %737 = vmatpush1.msra.mxu0 %v673
    %738 = vmatprep.subr.mxu0 %v699
    %739 = vmatpush1.msra.mxu0 %v698
    %740 = vmatprep.subr.mxu0 %v724
    %741 = vmatpush1.msra.mxu0 %v723
    %742 = vmatprep.subr.mxu0 0.0
    %743 = vmatpush1.msra.mxu0 0.0
    %744 = vmatprep.subr.mxu0 0.0
    %745 = vmatpush1.msra.mxu0 0.0
    %746 = vmatprep.subr.mxu0 0.0
    %747 = vmatpush1.msra.mxu0 0.0
    %748 = vmatprep.subr.mxu0 0.0
    %749 = vmatpush1.msra.mxu0 0.0
    %750 = vmatprep.subr.mxu0 0.0
    %751 = vmatpush1.msra.mxu0 0.0
    %752 = vmatprep.subr.mxu0 0.0
    %753 = vmatpush1.msra.mxu0 0.0
    %754 = vmatprep.subr.mxu0 0.0
    %755 = vmatpush1.msra.mxu0 0.0
    %756 = vmatprep.subr.mxu0 0.0
    %757 = vmatpush1.msra.mxu0 0.0
    %758 = vmatprep.subr.mxu0 0.0
    %759 = vmatpush1.msra.mxu0 0.0
    %760 = vmatprep.subr.mxu0 0.0
    %761 = vmatpush1.msra.mxu0 0.0
    %762 = vmatprep.subr.mxu0 0.0
    %763 = vmatpush1.msra.mxu0 0.0
    %764 = vmatprep.subr.mxu0 0.0
    %765 = vmatpush1.msra.mxu0 0.0
    %766 = vmatprep.subr.mxu0 0.0
    %767 = vmatpush1.msra.mxu0 0.0
    %768 = vmatprep.subr.mxu0 0.0
    %769 = vmatpush1.msra.mxu0 0.0
    %770 = vmatprep.subr.mxu0 0.0
    %771 = vmatpush1.msra.mxu0 0.0
    %772 = vmatprep.subr.mxu0 0.0
    %773 = vmatpush1.msra.mxu0 0.0
    %774 = vmatprep.subr.mxu0 0.0
    %775 = vmatpush1.msra.mxu0 0.0
    %776 = vmatprep.subr.mxu0 0.0
    %777 = vmatpush1.msra.mxu0 0.0
    %778 = vmatprep.subr.mxu0 0.0
    %779 = vmatpush1.msra.mxu0 0.0
    %780 = vmatprep.subr.mxu0 0.0
    %781 = vmatpush1.msra.mxu0 0.0
    %782 = vmatprep.subr.mxu0 0.0
    %783 = vmatpush1.msra.mxu0 0.0
    %784 = vmatprep.subr.mxu0 0.0
    %785 = vmatpush1.msra.mxu0 0.0
    %786 = vmatprep.subr.mxu0 0.0
    %787 = vmatpush1.msra.mxu0 0.0
    %788 = vmatprep.subr.mxu0 0.0
    %789 = vmatpush1.msra.mxu0 0.0
    %790 = vmatprep.subr.mxu0 0.0
    %791 = vmatpush1.msra.mxu0 0.0
    %792 = vmatprep.subr.mxu0 0.0
    %793 = vmatpush1.msra.mxu0 0.0
    %794 = vmatprep.subr.mxu0 0.0
    %795 = vmatpush1.msra.mxu0 0.0
    %796 = vmatprep.subr.mxu0 0.0
    %797 = vmatpush1.msra.mxu0 0.0
    %798 = vmatprep.subr.mxu0 0.0
    %799 = vmatpush1.msra.mxu0 0.0
    %800 = vmatprep.mubr.f32.mxu0 0.0
    %801 = vmatmul.mubr.f32.gmra.mrb[0].mxu0 %v731
    %v802 = vpop.f32.mrb[0].mxu0
    %v803 = vadd.f32 0.0, %v802
    %v804 = vpop.f32.mrb[0].mxu0
    %v805 = vadd.f32 0.0, %v804
    %806 = vmatprep.mubr.f32.mxu0 0.0
    %807 = vmatmul.mubr.f32.gmra.mrb[0].mxu0 %v734
    %v808 = vpop.f32.mrb[0].mxu0
    %v809 = vadd.f32 0.0, %v808
    %v810 = vpop.f32.mrb[0].mxu0
    %v811 = vadd.f32 0.0, %v810
    %812 = vdwg.mxu0
    %813 = vmatprep.subr.mxu0 %v676
    %814 = vmatpush1.msra.mxu0 %v675
    %815 = vmatprep.subr.mxu0 %v701
    %816 = vmatpush1.msra.mxu0 %v700
    %817 = vmatprep.subr.mxu0 %v726
    %818 = vmatpush1.msra.mxu0 %v725
    %819 = vmatprep.subr.mxu0 0.0
    %820 = vmatpush1.msra.mxu0 0.0
    %821 = vmatprep.subr.mxu0 0.0
    %822 = vmatpush1.msra.mxu0 0.0
    %823 = vmatprep.subr.mxu0 0.0
    %824 = vmatpush1.msra.mxu0 0.0
    %825 = vmatprep.subr.mxu0 0.0
    %826 = vmatpush1.msra.mxu0 0.0
    %827 = vmatprep.subr.mxu0 0.0
    %828 = vmatpush1.msra.mxu0 0.0
    %829 = vmatprep.subr.mxu0 0.0
    %830 = vmatpush1.msra.mxu0 0.0
    %831 = vmatprep.subr.mxu0 0.0
    %832 = vmatpush1.msra.mxu0 0.0
    %833 = vmatprep.subr.mxu0 0.0
    %834 = vmatpush1.msra.mxu0 0.0
    %835 = vmatprep.subr.mxu0 0.0
    %836 = vmatpush1.msra.mxu0 0.0
    %837 = vmatprep.subr.mxu0 0.0
    %838 = vmatpush1.msra.mxu0 0.0
    %839 = vmatprep.subr.mxu0 0.0
    %840 = vmatpush1.msra.mxu0 0.0
    %841 = vmatprep.subr.mxu0 0.0
    %842 = vmatpush1.msra.mxu0 0.0
    %843 = vmatprep.subr.mxu0 0.0
    %844 = vmatpush1.msra.mxu0 0.0
    %845 = vmatprep.subr.mxu0 0.0
    %846 = vmatpush1.msra.mxu0 0.0
    %847 = vmatprep.subr.mxu0 0.0
    %848 = vmatpush1.msra.mxu0 0.0
    %849 = vmatprep.subr.mxu0 0.0
    %850 = vmatpush1.msra.mxu0 0.0
    %851 = vmatprep.subr.mxu0 0.0
    %852 = vmatpush1.msra.mxu0 0.0
    %853 = vmatprep.subr.mxu0 0.0
    %854 = vmatpush1.msra.mxu0 0.0
    %855 = vmatprep.subr.mxu0 0.0
    %856 = vmatpush1.msra.mxu0 0.0
    %857 = vmatprep.subr.mxu0 0.0
    %858 = vmatpush1.msra.mxu0 0.0
    %859 = vmatprep.subr.mxu0 0.0
    %860 = vmatpush1.msra.mxu0 0.0
    %861 = vmatprep.subr.mxu0 0.0
    %862 = vmatpush1.msra.mxu0 0.0
    %863 = vmatprep.subr.mxu0 0.0
    %864 = vmatpush1.msra.mxu0 0.0
    %865 = vmatprep.subr.mxu0 0.0
    %866 = vmatpush1.msra.mxu0 0.0
    %867 = vmatprep.subr.mxu0 0.0
    %868 = vmatpush1.msra.mxu0 0.0
    %869 = vmatprep.subr.mxu0 0.0
    %870 = vmatpush1.msra.mxu0 0.0
    %871 = vmatprep.subr.mxu0 0.0
    %872 = vmatpush1.msra.mxu0 0.0
    %873 = vmatprep.subr.mxu0 0.0
    %874 = vmatpush1.msra.mxu0 0.0
    %875 = vmatprep.subr.mxu0 0.0
    %876 = vmatpush1.msra.mxu0 0.0
    %877 = vmatprep.mubr.f32.mxu0 0.0
    %878 = vmatmul.mubr.f32.gmra.mrb[0].mxu0 %v731
    %v879 = vpop.f32.mrb[0].mxu0
    %v880 = vadd.f32 0.0, %v879
    %v881 = vpop.f32.mrb[0].mxu0
    %v882 = vadd.f32 0.0, %v881
    %883 = vmatprep.mubr.f32.mxu0 0.0
    %884 = vmatmul.mubr.f32.gmra.mrb[0].mxu0 %v734
    %v885 = vpop.f32.mrb[0].mxu0
    %v886 = vadd.f32 0.0, %v885
    %v887 = vpop.f32.mrb[0].mxu0
    %v888 = vadd.f32 0.0, %v887
    %889 = vdwg.mxu0
    %v890 = vadd.f32 %v565, %v803
    %v891 = vadd.f32 %v567, %v805
    %v892 = vadd.f32 %v642, %v880
    %v893 = vadd.f32 %v644, %v882
    %v894 = vadd.f32 %v571, %v809
    %v895 = vadd.f32 %v573, %v811
    %v896 = vadd.f32 %v648, %v886
    %v897 = vadd.f32 %v650, %v888
    %vm898 = vcmp.gt.f32.partialorder %v890, 0.0
    %vm899 = vcmp.gt.f32.partialorder %v891, 0.0
    %vm900 = vcmp.gt.f32.partialorder %v892, 0.0
    %vm901 = vcmp.gt.f32.partialorder %v893, 0.0
    %vm902 = vcmp.gt.f32.partialorder %v894, 0.0
    %vm903 = vcmp.gt.f32.partialorder %v895, 0.0
    %vm904 = vcmp.gt.f32.partialorder %v896, 0.0
    %vm905 = vcmp.gt.f32.partialorder %v897, 0.0
    %v906 = vmul.f32 %v890, 0.01
    %v907 = vmul.f32 %v891, 0.01
    %v908 = vmul.f32 %v892, 0.01
    %v909 = vmul.f32 %v893, 0.01
    %v910 = vmul.f32 %v894, 0.01
    %v911 = vmul.f32 %v895, 0.01
    %v912 = vmul.f32 %v896, 0.01
    %v913 = vmul.f32 %v897, 0.01
    %v914 = vsel %vm898, %v890, %v906
    %v915 = vsel %vm899, %v891, %v907
    %v916 = vsel %vm900, %v892, %v908
    %v917 = vsel %vm901, %v893, %v909
    %v918 = vsel %vm902, %v894, %v910
    %v919 = vsel %vm903, %v895, %v911
    %v920 = vsel %vm904, %v896, %v912
    %v921 = vsel %vm905, %v897, %v913
    %922 = vrot.lane.b32.xlu0 %v914, 17
    %v923 = vpop.permute.xlu0 %922
    %924 = vrot.lane.b32.xlu0 %v918, 17
    %v925 = vpop.permute.xlu0 %924
    %926 = vrot.lane.b32.xlu0 %v915, 17
    %v927 = vpop.permute.xlu0 %926
    %928 = vrot.lane.b32.xlu0 %v919, 17
    %v929 = vpop.permute.xlu0 %928
    %930 = vrot.lane.b32.xlu0 %v916, 17
    %v931 = vpop.permute.xlu0 %930
    %932 = vrot.lane.b32.xlu0 %v920, 17
    %v933 = vpop.permute.xlu0 %932
    %934 = vrot.lane.b32.xlu0 %v917, 17
    %v935 = vpop.permute.xlu0 %934
    %936 = vrot.lane.b32.xlu0 %v921, 17
    %v937 = vpop.permute.xlu0 %936
    %v938 = vsel %vm201, %v931, %v935
    %v939 = vsel %vm201, %v933, %v937
    %v940 = vsel %vm201, %v927, %v931
    %v941 = vsel %vm201, %v929, %v933
    %v942 = vsel %vm201, %v923, %v927
    %v943 = vsel %vm201, %v925, %v929
    %v944 = vsel %vm201, %v935, %v923
    %v945 = vsel %vm201, %v937, %v925
    %v946 = vsel %vm210, %v944, 0.0
    %v947 = vsel %vm211, %v942, 0.0
    %v948 = vsel %vm212, %v940, 0.0
    %v949 = vsel %vm213, %v938, 0.0
    %v950 = vsel %vm210, %v945, 0.0
    %v951 = vsel %vm211, %v943, 0.0
    %v952 = vsel %vm212, %v941, 0.0
    %v953 = vsel %vm213, %v939, 0.0
    %954 = vrot.lane.b32.xlu0 %v914, 16
    %v955 = vpop.permute.xlu0 %954
    %956 = vrot.lane.b32.xlu0 %v918, 16
    %v957 = vpop.permute.xlu0 %956
    %958 = vrot.lane.b32.xlu0 %v915, 16
    %v959 = vpop.permute.xlu0 %958
    %960 = vrot.lane.b32.xlu0 %v919, 16
    %v961 = vpop.permute.xlu0 %960
    %962 = vrot.lane.b32.xlu0 %v916, 16
    %v963 = vpop.permute.xlu0 %962
    %964 = vrot.lane.b32.xlu0 %v920, 16
    %v965 = vpop.permute.xlu0 %964
    %966 = vrot.lane.b32.xlu0 %v917, 16
    %v967 = vpop.permute.xlu0 %966
    %968 = vrot.lane.b32.xlu0 %v921, 16
    %v969 = vpop.permute.xlu0 %968
    %v970 = vsel %vm226, %v963, %v967
    %v971 = vsel %vm226, %v965, %v969
    %v972 = vsel %vm226, %v959, %v963
    %v973 = vsel %vm226, %v961, %v965
    %v974 = vsel %vm226, %v955, %v959
    %v975 = vsel %vm226, %v957, %v961
    %v976 = vsel %vm226, %v967, %v955
    %v977 = vsel %vm226, %v969, %v957
    %v978 = vsel %vm235, %v976, 0.0
    %v979 = vsel %vm236, %v974, 0.0
    %v980 = vsel %vm237, %v972, 0.0
    %v981 = vsel %vm238, %v970, 0.0
    %v982 = vsel %vm235, %v977, 0.0
    %v983 = vsel %vm236, %v975, 0.0
    %v984 = vsel %vm237, %v973, 0.0
    %v985 = vsel %vm238, %v971, 0.0
    %986 = vrot.lane.b32.xlu0 %v914, 15
    %v987 = vpop.permute.xlu0 %986
    %988 = vrot.lane.b32.xlu0 %v918, 15
    %v989 = vpop.permute.xlu0 %988
    %990 = vrot.lane.b32.xlu0 %v915, 15
    %v991 = vpop.permute.xlu0 %990
    %992 = vrot.lane.b32.xlu0 %v919, 15
    %v993 = vpop.permute.xlu0 %992
    %994 = vrot.lane.b32.xlu0 %v916, 15
    %v995 = vpop.permute.xlu0 %994
    %996 = vrot.lane.b32.xlu0 %v920, 15
    %v997 = vpop.permute.xlu0 %996
    %998 = vrot.lane.b32.xlu0 %v917, 15
    %v999 = vpop.permute.xlu0 %998
    %1000 = vrot.lane.b32.xlu0 %v921, 15
    %v1001 = vpop.permute.xlu0 %1000
    %v1002 = vsel %vm251, %v995, %v999
    %v1003 = vsel %vm251, %v997, %v1001
    %v1004 = vsel %vm251, %v991, %v995
    %v1005 = vsel %vm251, %v993, %v997
    %v1006 = vsel %vm251, %v987, %v991
    %v1007 = vsel %vm251, %v989, %v993
    %v1008 = vsel %vm251, %v999, %v987
    %v1009 = vsel %vm251, %v1001, %v989
    %v1010 = vsel %vm260, %v1008, 0.0
    %v1011 = vsel %vm261, %v1006, 0.0
    %v1012 = vsel %vm262, %v1004, 0.0
    %v1013 = vsel %vm263, %v1002, 0.0
    %v1014 = vsel %vm260, %v1009, 0.0
    %v1015 = vsel %vm261, %v1007, 0.0
    %v1016 = vsel %vm262, %v1005, 0.0
    %v1017 = vsel %vm263, %v1003, 0.0
    %v1018 = vld [vmem:[#allocation6] sm:$0x7]
    %1019 = vrot.lane.b32.xlu0 %v914, 1
    %v1020 = vpop.permute.xlu0 %1019
    %1021 = vrot.lane.b32.xlu0 %v918, 1
    %v1022 = vpop.permute.xlu0 %1021
    %1023 = vrot.lane.b32.xlu0 %v915, 1
    %v1024 = vpop.permute.xlu0 %1023
    %1025 = vrot.lane.b32.xlu0 %v919, 1
    %v1026 = vpop.permute.xlu0 %1025
    %1027 = vrot.lane.b32.xlu0 %v916, 1
    %v1028 = vpop.permute.xlu0 %1027
    %1029 = vrot.lane.b32.xlu0 %v920, 1
    %v1030 = vpop.permute.xlu0 %1029
    %1031 = vrot.lane.b32.xlu0 %v917, 1
    %v1032 = vpop.permute.xlu0 %1031
    %1033 = vrot.lane.b32.xlu0 %v921, 1
    %v1034 = vpop.permute.xlu0 %1033
    %v1035 = vsel %vm278, %v1028, %v1032
    %v1036 = vsel %vm278, %v1030, %v1034
    %v1037 = vsel %vm278, %v1024, %v1028
    %v1038 = vsel %vm278, %v1026, %v1030
    %v1039 = vsel %vm278, %v1020, %v1024
    %v1040 = vsel %vm278, %v1022, %v1026
    %v1041 = vsel %vm278, %v1032, %v1020
    %v1042 = vsel %vm278, %v1034, %v1022
    %v1043 = vsel %vm287, %v1041, 0.0
    %v1044 = vsel %vm288, %v1039, 0.0
    %v1045 = vsel %vm289, %v1037, 0.0
    %v1046 = vsel %vm290, %v1035, 0.0
    %v1047 = vsel %vm287, %v1042, 0.0
    %v1048 = vsel %vm288, %v1040, 0.0
    %v1049 = vsel %vm289, %v1038, 0.0
    %v1050 = vsel %vm290, %v1036, 0.0
    %1051 = vrot.lane.b32.xlu0 %v914, 127
    %v1052 = vpop.permute.xlu0 %1051
    %1053 = vrot.lane.b32.xlu0 %v918, 127
    %v1054 = vpop.permute.xlu0 %1053
    %1055 = vrot.lane.b32.xlu0 %v915, 127
    %v1056 = vpop.permute.xlu0 %1055
    %1057 = vrot.lane.b32.xlu0 %v919, 127
    %v1058 = vpop.permute.xlu0 %1057
    %1059 = vrot.lane.b32.xlu0 %v916, 127
    %v1060 = vpop.permute.xlu0 %1059
    %1061 = vrot.lane.b32.xlu0 %v920, 127
    %v1062 = vpop.permute.xlu0 %1061
    %1063 = vrot.lane.b32.xlu0 %v917, 127
    %v1064 = vpop.permute.xlu0 %1063
    %1065 = vrot.lane.b32.xlu0 %v921, 127
    %v1066 = vpop.permute.xlu0 %1065
    %v1067 = vsel %vm303, %v1060, %v1064
    %v1068 = vsel %vm303, %v1062, %v1066
    %v1069 = vsel %vm303, %v1056, %v1060
    %v1070 = vsel %vm303, %v1058, %v1062
    %v1071 = vsel %vm303, %v1052, %v1056
    %v1072 = vsel %vm303, %v1054, %v1058
    %v1073 = vsel %vm303, %v1064, %v1052
    %v1074 = vsel %vm303, %v1066, %v1054
    %v1075 = vsel %vm312, %v1071, 0.0
    %v1076 = vsel %vm313, %v1069, 0.0
    %v1077 = vsel %vm314, %v1067, 0.0
    %v1078 = vsel %vm315, %v1073, 0.0
    %v1079 = vsel %vm312, %v1072, 0.0
    %v1080 = vsel %vm313, %v1070, 0.0
    %v1081 = vsel %vm314, %v1068, 0.0
    %v1082 = vsel %vm315, %v1074, 0.0
    %s1083 = scalar_lea.vmem [#allocation6], 4
    %v1084 = vld [vmem:[%s1083] sm:$0x7]
    %1086 = vset.pattern.permute.xlu0 48
    %1087 = vperm.xlu0 %1086, %v1084
    %v1088 = vpop.permute.xlu0 %1087
    %vm1090 = vcmask 392192
    %v1091 = vsel %vm1090, %v1084, 0
    %1093 = vmatprep.subr.mxu0 %v1044
    %1094 = vmatpush1.msra.mxu0 %v1043
    %1095 = vmatprep.subr.mxu0 %v1048
    %1096 = vmatpush1.msra.mxu0 %v1047
    %1097 = vmatprep.subr.mxu0 %v915
    %1098 = vmatpush1.msra.mxu0 %v914
    %1099 = vmatprep.subr.mxu0 %v919
    %1100 = vmatpush1.msra.mxu0 %v918
    %1101 = vmatprep.subr.mxu0 %v1076
    %1102 = vmatpush1.msra.mxu0 %v1075
    %1103 = vmatprep.subr.mxu0 %v1080
    %1104 = vmatpush1.msra.mxu0 %v1079
    %1105 = vmatprep.subr.mxu0 0.0
    %1106 = vmatpush1.msra.mxu0 0.0
    %1107 = vmatprep.subr.mxu0 0.0
    %1108 = vmatpush1.msra.mxu0 0.0
    %1109 = vmatprep.subr.mxu0 0.0
    %1110 = vmatpush1.msra.mxu0 0.0
    %1111 = vmatprep.subr.mxu0 0.0
    %1112 = vmatpush1.msra.mxu0 0.0
    %1113 = vmatprep.subr.mxu0 0.0
    %1114 = vmatpush1.msra.mxu0 0.0
    %1115 = vmatprep.subr.mxu0 0.0
    %1116 = vmatpush1.msra.mxu0 0.0
    %1117 = vmatprep.subr.mxu0 0.0
    %1118 = vmatpush1.msra.mxu0 0.0
    %1119 = vmatprep.subr.mxu0 0.0
    %1120 = vmatpush1.msra.mxu0 0.0
    %1121 = vmatprep.subr.mxu0 0.0
    %1122 = vmatpush1.msra.mxu0 0.0
    %1123 = vmatprep.subr.mxu0 0.0
    %1124 = vmatpush1.msra.mxu0 0.0
    %1125 = vmatprep.subr.mxu0 0.0
    %1126 = vmatpush1.msra.mxu0 0.0
    %1127 = vmatprep.subr.mxu0 0.0
    %1128 = vmatpush1.msra.mxu0 0.0
    %1129 = vmatprep.subr.mxu0 0.0
    %1130 = vmatpush1.msra.mxu0 0.0
    %1131 = vmatprep.subr.mxu0 0.0
    %1132 = vmatpush1.msra.mxu0 0.0
    %1133 = vmatprep.subr.mxu0 0.0
    %1134 = vmatpush1.msra.mxu0 0.0
    %1135 = vmatprep.subr.mxu0 0.0
    %1136 = vmatpush1.msra.mxu0 0.0
    %1137 = vmatprep.subr.mxu0 0.0
    %1138 = vmatpush1.msra.mxu0 0.0
    %1139 = vmatprep.subr.mxu0 0.0
    %1140 = vmatpush1.msra.mxu0 0.0
    %1141 = vmatprep.subr.mxu0 0.0
    %1142 = vmatpush1.msra.mxu0 0.0
    %1143 = vmatprep.subr.mxu0 0.0
    %1144 = vmatpush1.msra.mxu0 0.0
    %1145 = vmatprep.subr.mxu0 0.0
    %1146 = vmatpush1.msra.mxu0 0.0
    %1147 = vmatprep.subr.mxu0 0.0
    %1148 = vmatpush1.msra.mxu0 0.0
    %1149 = vmatprep.subr.mxu0 0.0
    %1150 = vmatpush1.msra.mxu0 0.0
    %1151 = vmatprep.subr.mxu0 0.0
    %1152 = vmatpush1.msra.mxu0 0.0
    %1153 = vmatprep.subr.mxu0 0.0
    %1154 = vmatpush1.msra.mxu0 0.0
    %1155 = vmatprep.subr.mxu0 0.0
    %1156 = vmatpush1.msra.mxu0 0.0
    %1157 = vmatprep.mubr.f32.mxu0 0.0
    %1158 = vmatmul.mubr.f32.gmra.mrb[0].mxu0 %v1091
    %v1159 = vpop.f32.mrb[0].mxu0
    %v1160 = vadd.f32 %v1088, %v1159
    %v1161 = vpop.f32.mrb[0].mxu0
    %v1162 = vadd.f32 %v1088, %v1161
    %1163 = vdwg.mxu0
    %1164 = vmatprep.subr.mxu0 %v1046
    %1165 = vmatpush1.msra.mxu0 %v1045
    %1166 = vmatprep.subr.mxu0 %v1050
    %1167 = vmatpush1.msra.mxu0 %v1049
    %1168 = vmatprep.subr.mxu0 %v917
    %1169 = vmatpush1.msra.mxu0 %v916
    %1170 = vmatprep.subr.mxu0 %v921
    %1171 = vmatpush1.msra.mxu0 %v920
    %1172 = vmatprep.subr.mxu0 %v1078
    %1173 = vmatpush1.msra.mxu0 %v1077
    %1174 = vmatprep.subr.mxu0 %v1082
    %1175 = vmatpush1.msra.mxu0 %v1081
    %1176 = vmatprep.subr.mxu0 0.0
    %1177 = vmatpush1.msra.mxu0 0.0
    %1178 = vmatprep.subr.mxu0 0.0
    %1179 = vmatpush1.msra.mxu0 0.0
    %1180 = vmatprep.subr.mxu0 0.0
    %1181 = vmatpush1.msra.mxu0 0.0
    %1182 = vmatprep.subr.mxu0 0.0
    %1183 = vmatpush1.msra.mxu0 0.0
    %1184 = vmatprep.subr.mxu0 0.0
    %1185 = vmatpush1.msra.mxu0 0.0
    %1186 = vmatprep.subr.mxu0 0.0
    %1187 = vmatpush1.msra.mxu0 0.0
    %1188 = vmatprep.subr.mxu0 0.0
    %1189 = vmatpush1.msra.mxu0 0.0
    %1190 = vmatprep.subr.mxu0 0.0
    %1191 = vmatpush1.msra.mxu0 0.0
    %1192 = vmatprep.subr.mxu0 0.0
    %1193 = vmatpush1.msra.mxu0 0.0
    %1194 = vmatprep.subr.mxu0 0.0
    %1195 = vmatpush1.msra.mxu0 0.0
    %1196 = vmatprep.subr.mxu0 0.0
    %1197 = vmatpush1.msra.mxu0 0.0
    %1198 = vmatprep.subr.mxu0 0.0
    %1199 = vmatpush1.msra.mxu0 0.0
    %1200 = vmatprep.subr.mxu0 0.0
    %1201 = vmatpush1.msra.mxu0 0.0
    %1202 = vmatprep.subr.mxu0 0.0
    %1203 = vmatpush1.msra.mxu0 0.0
    %1204 = vmatprep.subr.mxu0 0.0
    %1205 = vmatpush1.msra.mxu0 0.0
    %1206 = vmatprep.subr.mxu0 0.0
    %1207 = vmatpush1.msra.mxu0 0.0
    %1208 = vmatprep.subr.mxu0 0.0
    %1209 = vmatpush1.msra.mxu0 0.0
    %1210 = vmatprep.subr.mxu0 0.0
    %1211 = vmatpush1.msra.mxu0 0.0
    %1212 = vmatprep.subr.mxu0 0.0
    %1213 = vmatpush1.msra.mxu0 0.0
    %1214 = vmatprep.subr.mxu0 0.0
    %1215 = vmatpush1.msra.mxu0 0.0
    %1216 = vmatprep.subr.mxu0 0.0
    %1217 = vmatpush1.msra.mxu0 0.0
    %1218 = vmatprep.subr.mxu0 0.0
    %1219 = vmatpush1.msra.mxu0 0.0
    %1220 = vmatprep.subr.mxu0 0.0
    %1221 = vmatpush1.msra.mxu0 0.0
    %1222 = vmatprep.subr.mxu0 0.0
    %1223 = vmatpush1.msra.mxu0 0.0
    %1224 = vmatprep.subr.mxu0 0.0
    %1225 = vmatpush1.msra.mxu0 0.0
    %1226 = vmatprep.subr.mxu0 0.0
    %1227 = vmatpush1.msra.mxu0 0.0
    %1228 = vmatprep.mubr.f32.mxu0 0.0
    %1229 = vmatmul.mubr.f32.gmra.mrb[0].mxu0 %v1091
    %v1230 = vpop.f32.mrb[0].mxu0
    %v1231 = vadd.f32 %v1088, %v1230
    %v1232 = vpop.f32.mrb[0].mxu0
    %v1233 = vadd.f32 %v1088, %v1232
    %1234 = vdwg.mxu0
    %v1236 = vsel %vm1090, %v1018, 0
    %1238 = vmatprep.subr.mxu0 %v947
    %1239 = vmatpush1.msra.mxu0 %v946
    %1240 = vmatprep.subr.mxu0 %v951
    %1241 = vmatpush1.msra.mxu0 %v950
    %1242 = vmatprep.subr.mxu0 %v979
    %1243 = vmatpush1.msra.mxu0 %v978
    %1244 = vmatprep.subr.mxu0 %v983
    %1245 = vmatpush1.msra.mxu0 %v982
    %1246 = vmatprep.subr.mxu0 %v1011
    %1247 = vmatpush1.msra.mxu0 %v1010
    %1248 = vmatprep.subr.mxu0 %v1015
    %1249 = vmatpush1.msra.mxu0 %v1014
    %1250 = vmatprep.subr.mxu0 0.0
    %1251 = vmatpush1.msra.mxu0 0.0
    %1252 = vmatprep.subr.mxu0 0.0
    %1253 = vmatpush1.msra.mxu0 0.0
    %1254 = vmatprep.subr.mxu0 0.0
    %1255 = vmatpush1.msra.mxu0 0.0
    %1256 = vmatprep.subr.mxu0 0.0
    %1257 = vmatpush1.msra.mxu0 0.0
    %1258 = vmatprep.subr.mxu0 0.0
    %1259 = vmatpush1.msra.mxu0 0.0
    %1260 = vmatprep.subr.mxu0 0.0
    %1261 = vmatpush1.msra.mxu0 0.0
    %1262 = vmatprep.subr.mxu0 0.0
    %1263 = vmatpush1.msra.mxu0 0.0
    %1264 = vmatprep.subr.mxu0 0.0
    %1265 = vmatpush1.msra.mxu0 0.0
    %1266 = vmatprep.subr.mxu0 0.0
    %1267 = vmatpush1.msra.mxu0 0.0
    %1268 = vmatprep.subr.mxu0 0.0
    %1269 = vmatpush1.msra.mxu0 0.0
    %1270 = vmatprep.subr.mxu0 0.0
    %1271 = vmatpush1.msra.mxu0 0.0
    %1272 = vmatprep.subr.mxu0 0.0
    %1273 = vmatpush1.msra.mxu0 0.0
    %1274 = vmatprep.subr.mxu0 0.0
    %1275 = vmatpush1.msra.mxu0 0.0
    %1276 = vmatprep.subr.mxu0 0.0
    %1277 = vmatpush1.msra.mxu0 0.0
    %1278 = vmatprep.subr.mxu0 0.0
    %1279 = vmatpush1.msra.mxu0 0.0
    %1280 = vmatprep.subr.mxu0 0.0
    %1281 = vmatpush1.msra.mxu0 0.0
    %1282 = vmatprep.subr.mxu0 0.0
    %1283 = vmatpush1.msra.mxu0 0.0
    %1284 = vmatprep.subr.mxu0 0.0
    %1285 = vmatpush1.msra.mxu0 0.0
    %1286 = vmatprep.subr.mxu0 0.0
    %1287 = vmatpush1.msra.mxu0 0.0
    %1288 = vmatprep.subr.mxu0 0.0
    %1289 = vmatpush1.msra.mxu0 0.0
    %1290 = vmatprep.subr.mxu0 0.0
    %1291 = vmatpush1.msra.mxu0 0.0
    %1292 = vmatprep.subr.mxu0 0.0
    %1293 = vmatpush1.msra.mxu0 0.0
    %1294 = vmatprep.subr.mxu0 0.0
    %1295 = vmatpush1.msra.mxu0 0.0
    %1296 = vmatprep.subr.mxu0 0.0
    %1297 = vmatpush1.msra.mxu0 0.0
    %1298 = vmatprep.subr.mxu0 0.0
    %1299 = vmatpush1.msra.mxu0 0.0
    %1300 = vmatprep.subr.mxu0 0.0
    %1301 = vmatpush1.msra.mxu0 0.0
    %1302 = vmatprep.mubr.f32.mxu0 0.0
    %1303 = vmatmul.mubr.f32.gmra.mrb[0].mxu0 %v1236
    %v1304 = vpop.f32.mrb[0].mxu0
    %v1305 = vadd.f32 %v1160, %v1304
    %v1306 = vpop.f32.mrb[0].mxu0
    %v1307 = vadd.f32 %v1162, %v1306
    %1308 = vdwg.mxu0
    %1309 = vmatprep.subr.mxu0 %v949
    %1310 = vmatpush1.msra.mxu0 %v948
    %1311 = vmatprep.subr.mxu0 %v953
    %1312 = vmatpush1.msra.mxu0 %v952
    %1313 = vmatprep.subr.mxu0 %v981
    %1314 = vmatpush1.msra.mxu0 %v980
    %1315 = vmatprep.subr.mxu0 %v985
    %1316 = vmatpush1.msra.mxu0 %v984
    %1317 = vmatprep.subr.mxu0 %v1013
    %1318 = vmatpush1.msra.mxu0 %v1012
    %1319 = vmatprep.subr.mxu0 %v1017
    %1320 = vmatpush1.msra.mxu0 %v1016
    %1321 = vmatprep.subr.mxu0 0.0
    %1322 = vmatpush1.msra.mxu0 0.0
    %1323 = vmatprep.subr.mxu0 0.0
    %1324 = vmatpush1.msra.mxu0 0.0
    %1325 = vmatprep.subr.mxu0 0.0
    %1326 = vmatpush1.msra.mxu0 0.0
    %1327 = vmatprep.subr.mxu0 0.0
    %1328 = vmatpush1.msra.mxu0 0.0
    %1329 = vmatprep.subr.mxu0 0.0
    %1330 = vmatpush1.msra.mxu0 0.0
    %1331 = vmatprep.subr.mxu0 0.0
    %1332 = vmatpush1.msra.mxu0 0.0
    %1333 = vmatprep.subr.mxu0 0.0
    %1334 = vmatpush1.msra.mxu0 0.0
    %1335 = vmatprep.subr.mxu0 0.0
    %1336 = vmatpush1.msra.mxu0 0.0
    %1337 = vmatprep.subr.mxu0 0.0
    %1338 = vmatpush1.msra.mxu0 0.0
    %1339 = vmatprep.subr.mxu0 0.0
    %1340 = vmatpush1.msra.mxu0 0.0
    %1341 = vmatprep.subr.mxu0 0.0
    %1342 = vmatpush1.msra.mxu0 0.0
    %1343 = vmatprep.subr.mxu0 0.0
    %1344 = vmatpush1.msra.mxu0 0.0
    %1345 = vmatprep.subr.mxu0 0.0
    %1346 = vmatpush1.msra.mxu0 0.0
    %1347 = vmatprep.subr.mxu0 0.0
    %1348 = vmatpush1.msra.mxu0 0.0
    %1349 = vmatprep.subr.mxu0 0.0
    %1350 = vmatpush1.msra.mxu0 0.0
    %1351 = vmatprep.subr.mxu0 0.0
    %1352 = vmatpush1.msra.mxu0 0.0
    %1353 = vmatprep.subr.mxu0 0.0
    %1354 = vmatpush1.msra.mxu0 0.0
    %1355 = vmatprep.subr.mxu0 0.0
    %1356 = vmatpush1.msra.mxu0 0.0
    %1357 = vmatprep.subr.mxu0 0.0
    %1358 = vmatpush1.msra.mxu0 0.0
    %1359 = vmatprep.subr.mxu0 0.0
    %1360 = vmatpush1.msra.mxu0 0.0
    %1361 = vmatprep.subr.mxu0 0.0
    %1362 = vmatpush1.msra.mxu0 0.0
    %1363 = vmatprep.subr.mxu0 0.0
    %1364 = vmatpush1.msra.mxu0 0.0
    %1365 = vmatprep.subr.mxu0 0.0
    %1366 = vmatpush1.msra.mxu0 0.0
    %1367 = vmatprep.subr.mxu0 0.0
    %1368 = vmatpush1.msra.mxu0 0.0
    %1369 = vmatprep.subr.mxu0 0.0
    %1370 = vmatpush1.msra.mxu0 0.0
    %1371 = vmatprep.subr.mxu0 0.0
    %1372 = vmatpush1.msra.mxu0 0.0
    %1373 = vmatprep.mubr.f32.mxu0 0.0
    %1374 = vmatmul.mubr.f32.gmra.mrb[0].mxu0 %v1236
    %v1375 = vpop.f32.mrb[0].mxu0
    %v1376 = vadd.f32 %v1231, %v1375
    %v1377 = vpop.f32.mrb[0].mxu0
    %v1378 = vadd.f32 %v1233, %v1377
    %1379 = vdwg.mxu0
    %1380 = vrot.lane.b32.xlu0 %v914, 113
    %v1381 = vpop.permute.xlu0 %1380
    %1382 = vrot.lane.b32.xlu0 %v918, 113
    %v1383 = vpop.permute.xlu0 %1382
    %1384 = vrot.lane.b32.xlu0 %v915, 113
    %v1385 = vpop.permute.xlu0 %1384
    %1386 = vrot.lane.b32.xlu0 %v919, 113
    %v1387 = vpop.permute.xlu0 %1386
    %1388 = vrot.lane.b32.xlu0 %v916, 113
    %v1389 = vpop.permute.xlu0 %1388
    %1390 = vrot.lane.b32.xlu0 %v920, 113
    %v1391 = vpop.permute.xlu0 %1390
    %1392 = vrot.lane.b32.xlu0 %v917, 113
    %v1393 = vpop.permute.xlu0 %1392
    %1394 = vrot.lane.b32.xlu0 %v921, 113
    %v1395 = vpop.permute.xlu0 %1394
    %v1396 = vsel %vm660, %v1389, %v1393
    %v1397 = vsel %vm660, %v1391, %v1395
    %v1398 = vsel %vm660, %v1385, %v1389
    %v1399 = vsel %vm660, %v1387, %v1391
    %v1400 = vsel %vm660, %v1381, %v1385
    %v1401 = vsel %vm660, %v1383, %v1387
    %v1402 = vsel %vm660, %v1393, %v1381
    %v1403 = vsel %vm660, %v1395, %v1383
    %v1404 = vsel %vm669, %v1400, 0.0
    %v1405 = vsel %vm670, %v1398, 0.0
    %v1406 = vsel %vm671, %v1396, 0.0
    %v1407 = vsel %vm672, %v1402, 0.0
    %v1408 = vsel %vm669, %v1401, 0.0
    %v1409 = vsel %vm670, %v1399, 0.0
    %v1410 = vsel %vm671, %v1397, 0.0
    %v1411 = vsel %vm672, %v1403, 0.0
    %1412 = vrot.lane.b32.xlu0 %v914, 112
    %v1413 = vpop.permute.xlu0 %1412
    %1414 = vrot.lane.b32.xlu0 %v918, 112
    %v1415 = vpop.permute.xlu0 %1414
    %1416 = vrot.lane.b32.xlu0 %v915, 112
    %v1417 = vpop.permute.xlu0 %1416
    %1418 = vrot.lane.b32.xlu0 %v919, 112
    %v1419 = vpop.permute.xlu0 %1418
    %1420 = vrot.lane.b32.xlu0 %v916, 112
    %v1421 = vpop.permute.xlu0 %1420
    %1422 = vrot.lane.b32.xlu0 %v920, 112
    %v1423 = vpop.permute.xlu0 %1422
    %1424 = vrot.lane.b32.xlu0 %v917, 112
    %v1425 = vpop.permute.xlu0 %1424
    %1426 = vrot.lane.b32.xlu0 %v921, 112
    %v1427 = vpop.permute.xlu0 %1426
    %v1428 = vsel %vm685, %v1421, %v1425
    %v1429 = vsel %vm685, %v1423, %v1427
    %v1430 = vsel %vm685, %v1417, %v1421
    %v1431 = vsel %vm685, %v1419, %v1423
    %v1432 = vsel %vm685, %v1413, %v1417
    %v1433 = vsel %vm685, %v1415, %v1419
    %v1434 = vsel %vm685, %v1425, %v1413
    %v1435 = vsel %vm685, %v1427, %v1415
    %v1436 = vsel %vm694, %v1432, 0.0
    %v1437 = vsel %vm695, %v1430, 0.0
    %v1438 = vsel %vm696, %v1428, 0.0
    %v1439 = vsel %vm697, %v1434, 0.0
    %v1440 = vsel %vm694, %v1433, 0.0
    %v1441 = vsel %vm695, %v1431, 0.0
    %v1442 = vsel %vm696, %v1429, 0.0
    %v1443 = vsel %vm697, %v1435, 0.0
    %1444 = vrot.lane.b32.xlu0 %v914, 111
    %v1445 = vpop.permute.xlu0 %1444
    %1446 = vrot.lane.b32.xlu0 %v918, 111
    %v1447 = vpop.permute.xlu0 %1446
    %1448 = vrot.lane.b32.xlu0 %v915, 111
    %v1449 = vpop.permute.xlu0 %1448
    %1450 = vrot.lane.b32.xlu0 %v919, 111
    %v1451 = vpop.permute.xlu0 %1450
    %1452 = vrot.lane.b32.xlu0 %v916, 111
    %v1453 = vpop.permute.xlu0 %1452
    %1454 = vrot.lane.b32.xlu0 %v920, 111
    %v1455 = vpop.permute.xlu0 %1454
    %1456 = vrot.lane.b32.xlu0 %v917, 111
    %v1457 = vpop.permute.xlu0 %1456
    %1458 = vrot.lane.b32.xlu0 %v921, 111
    %v1459 = vpop.permute.xlu0 %1458
    %v1460 = vsel %vm710, %v1453, %v1457
    %v1461 = vsel %vm710, %v1455, %v1459
    %v1462 = vsel %vm710, %v1449, %v1453
    %v1463 = vsel %vm710, %v1451, %v1455
    %v1464 = vsel %vm710, %v1445, %v1449
    %v1465 = vsel %vm710, %v1447, %v1451
    %v1466 = vsel %vm710, %v1457, %v1445
    %v1467 = vsel %vm710, %v1459, %v1447
    %v1468 = vsel %vm719, %v1464, 0.0
    %v1469 = vsel %vm720, %v1462, 0.0
    %v1470 = vsel %vm721, %v1460, 0.0
    %v1471 = vsel %vm722, %v1466, 0.0
    %v1472 = vsel %vm719, %v1465, 0.0
    %v1473 = vsel %vm720, %v1463, 0.0
    %v1474 = vsel %vm721, %v1461, 0.0
    %v1475 = vsel %vm722, %v1467, 0.0
    %s1476 = scalar_lea.vmem [#allocation6], 8
    %v1477 = vld [vmem:[%s1476] sm:$0x7]
    %v1479 = vsel %vm1090, %v1477, 0
    %1481 = vmatprep.subr.mxu0 %v1405
    %1482 = vmatpush1.msra.mxu0 %v1404
    %1483 = vmatprep.subr.mxu0 %v1409
    %1484 = vmatpush1.msra.mxu0 %v1408
    %1485 = vmatprep.subr.mxu0 %v1437
    %1486 = vmatpush1.msra.mxu0 %v1436
    %1487 = vmatprep.subr.mxu0 %v1441
    %1488 = vmatpush1.msra.mxu0 %v1440
    %1489 = vmatprep.subr.mxu0 %v1469
    %1490 = vmatpush1.msra.mxu0 %v1468
    %1491 = vmatprep.subr.mxu0 %v1473
    %1492 = vmatpush1.msra.mxu0 %v1472
    %1493 = vmatprep.subr.mxu0 0.0
    %1494 = vmatpush1.msra.mxu0 0.0
    %1495 = vmatprep.subr.mxu0 0.0
    %1496 = vmatpush1.msra.mxu0 0.0
    %1497 = vmatprep.subr.mxu0 0.0
    %1498 = vmatpush1.msra.mxu0 0.0
    %1499 = vmatprep.subr.mxu0 0.0
    %1500 = vmatpush1.msra.mxu0 0.0
    %1501 = vmatprep.subr.mxu0 0.0
    %1502 = vmatpush1.msra.mxu0 0.0
    %1503 = vmatprep.subr.mxu0 0.0
    %1504 = vmatpush1.msra.mxu0 0.0
    %1505 = vmatprep.subr.mxu0 0.0
    %1506 = vmatpush1.msra.mxu0 0.0
    %1507 = vmatprep.subr.mxu0 0.0
    %1508 = vmatpush1.msra.mxu0 0.0
    %1509 = vmatprep.subr.mxu0 0.0
    %1510 = vmatpush1.msra.mxu0 0.0
    %1511 = vmatprep.subr.mxu0 0.0
    %1512 = vmatpush1.msra.mxu0 0.0
    %1513 = vmatprep.subr.mxu0 0.0
    %1514 = vmatpush1.msra.mxu0 0.0
    %1515 = vmatprep.subr.mxu0 0.0
    %1516 = vmatpush1.msra.mxu0 0.0
    %1517 = vmatprep.subr.mxu0 0.0
    %1518 = vmatpush1.msra.mxu0 0.0
    %1519 = vmatprep.subr.mxu0 0.0
    %1520 = vmatpush1.msra.mxu0 0.0
    %1521 = vmatprep.subr.mxu0 0.0
    %1522 = vmatpush1.msra.mxu0 0.0
    %1523 = vmatprep.subr.mxu0 0.0
    %1524 = vmatpush1.msra.mxu0 0.0
    %1525 = vmatprep.subr.mxu0 0.0
    %1526 = vmatpush1.msra.mxu0 0.0
    %1527 = vmatprep.subr.mxu0 0.0
    %1528 = vmatpush1.msra.mxu0 0.0
    %1529 = vmatprep.subr.mxu0 0.0
    %1530 = vmatpush1.msra.mxu0 0.0
    %1531 = vmatprep.subr.mxu0 0.0
    %1532 = vmatpush1.msra.mxu0 0.0
    %1533 = vmatprep.subr.mxu0 0.0
    %1534 = vmatpush1.msra.mxu0 0.0
    %1535 = vmatprep.subr.mxu0 0.0
    %1536 = vmatpush1.msra.mxu0 0.0
    %1537 = vmatprep.subr.mxu0 0.0
    %1538 = vmatpush1.msra.mxu0 0.0
    %1539 = vmatprep.subr.mxu0 0.0
    %1540 = vmatpush1.msra.mxu0 0.0
    %1541 = vmatprep.subr.mxu0 0.0
    %1542 = vmatpush1.msra.mxu0 0.0
    %1543 = vmatprep.subr.mxu0 0.0
    %1544 = vmatpush1.msra.mxu0 0.0
    %1545 = vmatprep.mubr.f32.mxu0 0.0
    %1546 = vmatmul.mubr.f32.gmra.mrb[0].mxu0 %v1479
    %v1547 = vpop.f32.mrb[0].mxu0
    %v1548 = vadd.f32 0.0, %v1547
    %v1549 = vpop.f32.mrb[0].mxu0
    %v1550 = vadd.f32 0.0, %v1549
    %1551 = vdwg.mxu0
    %1552 = vmatprep.subr.mxu0 %v1407
    %1553 = vmatpush1.msra.mxu0 %v1406
    %1554 = vmatprep.subr.mxu0 %v1411
    %1555 = vmatpush1.msra.mxu0 %v1410
    %1556 = vmatprep.subr.mxu0 %v1439
    %1557 = vmatpush1.msra.mxu0 %v1438
    %1558 = vmatprep.subr.mxu0 %v1443
    %1559 = vmatpush1.msra.mxu0 %v1442
    %1560 = vmatprep.subr.mxu0 %v1471
    %1561 = vmatpush1.msra.mxu0 %v1470
    %1562 = vmatprep.subr.mxu0 %v1475
    %1563 = vmatpush1.msra.mxu0 %v1474
    %1564 = vmatprep.subr.mxu0 0.0
    %1565 = vmatpush1.msra.mxu0 0.0
    %1566 = vmatprep.subr.mxu0 0.0
    %1567 = vmatpush1.msra.mxu0 0.0
    %1568 = vmatprep.subr.mxu0 0.0
    %1569 = vmatpush1.msra.mxu0 0.0
    %1570 = vmatprep.subr.mxu0 0.0
    %1571 = vmatpush1.msra.mxu0 0.0
    %1572 = vmatprep.subr.mxu0 0.0
    %1573 = vmatpush1.msra.mxu0 0.0
    %1574 = vmatprep.subr.mxu0 0.0
    %1575 = vmatpush1.msra.mxu0 0.0
    %1576 = vmatprep.subr.mxu0 0.0
    %1577 = vmatpush1.msra.mxu0 0.0
    %1578 = vmatprep.subr.mxu0 0.0
    %1579 = vmatpush1.msra.mxu0 0.0
    %1580 = vmatprep.subr.mxu0 0.0
    %1581 = vmatpush1.msra.mxu0 0.0
    %1582 = vmatprep.subr.mxu0 0.0
    %1583 = vmatpush1.msra.mxu0 0.0
    %1584 = vmatprep.subr.mxu0 0.0
    %1585 = vmatpush1.msra.mxu0 0.0
    %1586 = vmatprep.subr.mxu0 0.0
    %1587 = vmatpush1.msra.mxu0 0.0
    %1588 = vmatprep.subr.mxu0 0.0
    %1589 = vmatpush1.msra.mxu0 0.0
    %1590 = vmatprep.subr.mxu0 0.0
    %1591 = vmatpush1.msra.mxu0 0.0
    %1592 = vmatprep.subr.mxu0 0.0
    %1593 = vmatpush1.msra.mxu0 0.0
    %1594 = vmatprep.subr.mxu0 0.0
    %1595 = vmatpush1.msra.mxu0 0.0
    %1596 = vmatprep.subr.mxu0 0.0
    %1597 = vmatpush1.msra.mxu0 0.0
    %1598 = vmatprep.subr.mxu0 0.0
    %1599 = vmatpush1.msra.mxu0 0.0
    %1600 = vmatprep.subr.mxu0 0.0
    %1601 = vmatpush1.msra.mxu0 0.0
    %1602 = vmatprep.subr.mxu0 0.0
    %1603 = vmatpush1.msra.mxu0 0.0
    %1604 = vmatprep.subr.mxu0 0.0
    %1605 = vmatpush1.msra.mxu0 0.0
    %1606 = vmatprep.subr.mxu0 0.0
    %1607 = vmatpush1.msra.mxu0 0.0
    %1608 = vmatprep.subr.mxu0 0.0
    %1609 = vmatpush1.msra.mxu0 0.0
    %1610 = vmatprep.subr.mxu0 0.0
    %1611 = vmatpush1.msra.mxu0 0.0
    %1612 = vmatprep.subr.mxu0 0.0
    %1613 = vmatpush1.msra.mxu0 0.0
    %1614 = vmatprep.subr.mxu0 0.0
    %1615 = vmatpush1.msra.mxu0 0.0
    %1616 = vmatprep.mubr.f32.mxu0 0.0
    %1617 = vmatmul.mubr.f32.gmra.mrb[0].mxu0 %v1479
    %v1618 = vpop.f32.mrb[0].mxu0
    %v1619 = vadd.f32 0.0, %v1618
    %v1620 = vpop.f32.mrb[0].mxu0
    %v1621 = vadd.f32 0.0, %v1620
    %1622 = vdwg.mxu0
    %v1623 = vadd.f32 %v1305, %v1548
    %v1624 = vadd.f32 %v1307, %v1550
    %v1625 = vadd.f32 %v1376, %v1619
    %v1626 = vadd.f32 %v1378, %v1621
    %v1629 = vcombine.low %v1623, %v1624
    %1631 = vst [vmem:[%s3] sm:$0x77] %v1629
    %v1634 = vcombine.low %v1625, %v1626
    %s1636 = scalar_lea.vmem %s3, 8
    %1637 = vst [vmem:[%s1636] sm:$0x77] %v1634
    // Predicated region
    $region26: #{tpu_custom_call.1} parent=1 // pred_check
      _
    $region27: #{tpu_custom_call.1} parent=1 // pred_check_branch
      %1639 = sbr.rel (0) target = $region29
    $region28: #{tpu_custom_call.1} parent=1 // pred_region
      _
    $region29: #{tpu_custom_call.1} parent=1 // pred_fallthru
      _
    // Predicated region
    $region30: #{tpu_custom_call.1} parent=1 // pred_check
      _
    $region31: #{tpu_custom_call.1} parent=1 // pred_check_branch
      %1641 = sbr.rel (0) target = $region33
    $region32: #{tpu_custom_call.1} parent=1 // pred_region
      _
    $region33: #{tpu_custom_call.1} parent=1 // pred_fallthru
      _
    %1642 = vsyncpa [#allocation3], 1
    %1643 = vsyncpa [#allocation5], 1

</llo_original>
